<compile_context>
chip_gen: v5e
topology: v5e:2x2
jax: 0.10.0
libtpu: 0.0.40
codegen_flags: <defaults>
</compile_context>

<pallas_src>
import math

import jax
import jax.numpy as jnp
from jax.experimental import pallas as pl
from jax.experimental.pallas import tpu as pltpu

D_MODEL = 32
N_HEADS = 4
D_FF = 64
S_TGT = 8
S_SRC = 8
BATCH = 2
# TODO(synk): eps of the reference LayerNormalization is unspecified; using the
# PyTorch nn.LayerNorm default (1e-5).
EPS = 1e-5
NEG_INF = -1e9


# ----------------------------- in-kernel helpers ----------------------------- #
def _layernorm(x, gamma, beta):
    """Row-wise LayerNorm over the last dim. x: (N, D); gamma/beta: (1, D)."""
    mu = jnp.mean(x, axis=-1, keepdims=True)
    xc = x - mu
    var = jnp.mean(xc * xc, axis=-1, keepdims=True)
    return xc * jax.lax.rsqrt(var + EPS) * gamma + beta


# ------------------------------ wrapper helpers ------------------------------ #
def _packed_additive_mask(mask, batch, s_q, s_kv, n_heads):
    """(s_q, s_kv) keep-mask (>0 = attend) -> (B*s_q, H*B*s_kv) additive mask.

    Columns are ordered (head, batch, key) to match the kernel's head/batch-
    folded K/V slab.  Cross-batch columns get -1e9 so exp() flushes them to
    exactly 0 and the per-head softmax denominators stay correct.
    NOTE: a fully-masked (query, head) segment degenerates to a uniform
    distribution (same caveat as the previous kernel); not exercised here.
    """
    if mask is None:
        keep = jnp.ones((s_q, s_kv), jnp.float32)
    else:
        keep = (mask > 0).astype(jnp.float32)
    block_diag = jnp.kron(jnp.eye(batch, dtype=jnp.float32), keep)  # (B*s_q, B*s_kv)
    full = jnp.tile(block_diag, (1, n_heads))                       # (B*s_q, H*B*s_kv)
    return jnp.where(full > 0, 0.0, NEG_INF).astype(jnp.float32)


# --------------------------------- wrapper ------------------------------------ #
def transformer_decoder_layer(x, memory, tgt_mask, src_mask, params,
                              n_heads=N_HEADS):
    """Forward pass of TransformerDecoderLayer (eval semantics: dropout = id)."""
    B, S, D = x.shape
    _, S_src, _ = memory.shape
    d_ff = params['ff']['w1'].shape[1]
    assert D % n_heads == 0
    d_head = D // n_heads
    scale = 1.0 / math.sqrt(d_head)

    sa, ca, ff = params['sa'], params['ca'], params['ff']

    # ------------- wrapper-side packing (one-time, outside the kernel) -------
    # Softmax scale folded into the query projections (exact same math).
    w_attn = jnp.stack([
        sa['wq'] * scale, sa['wk'], sa['wv'], sa['wo'],
        ca['wq'] * scale, ca['wk'], ca['wv'], ca['wo'],
    ], axis=0).astype(jnp.float32)                                   # (8, D, D)
    w_ff1 = ff['w1'].astype(jnp.float32)                             # (D, F)
    w_ff2 = ff['w2'].astype(jnp.float32)                             # (F, D)

    bias_w = max(D, d_ff)

    def row(b):
        b = jnp.reshape(b, (1, -1)).astype(jnp.float32)
        return jnp.pad(b, ((0, 0), (0, bias_w - b.shape[1])))

    b_pack = jnp.concatenate([
        row(sa['bq'] * scale), row(sa['bk']), row(sa['bv']), row(sa['bo']),
        row(ca['bq'] * scale), row(ca['bk']), row(ca['bv']), row(ca['bo']),
        row(ff['b1']), row(ff['b2']),
    ], axis=0)                                                       # (10, bias_w)

    ln_pack = jnp.concatenate([
        jnp.reshape(params['ln1']['g'], (1, D)), jnp.reshape(params['ln1']['b'], (1, D)),
        jnp.reshape(params['ln2']['g'], (1, D)), jnp.reshape(params['ln2']['b'], (1, D)),
        jnp.reshape(params['ln3']['g'], (1, D)), jnp.reshape(params['ln3']['b'], (1, D)),
    ], axis=0)                                                       # (6, D)

    # 0/1 lane masks selecting each head's feature block.
    head_masks = (jnp.arange(D)[None, :] // d_head
                  == jnp.arange(n_heads)[:, None]).astype(jnp.float32)   # (H, D)

    # Block-diagonal additive masks with heads folded into the column axis
    # (reference convention: mask > 0 -> attend, == 0 -> blocked).
    tgt_add = _packed_additive_mask(tgt_mask, B, S, S, n_heads)      # (B*S, H*B*S)
    src_add = _packed_additive_mask(src_mask, B, S, S_src, n_heads)  # (B*S, H*B*S_src)

    x2d = x.reshape(B * S, D).astype(jnp.float32)
    mem2d = memory.reshape(B * S_src, D).astype(jnp.float32)

    # --------------------------------- kernel --------------------------------
    def kernel(x_ref, mem_ref, tmask_ref, smask_ref, hm_ref,
               w_attn_ref, w_ff1_ref, w_ff2_ref, b_ref, ln_ref, out_ref):
        x2 = x_ref[...]                     # (B*S, D)
        mem2 = mem_ref[...]                 # (B*S_src, D)
        hm = hm_ref[...]                    # (H, D)
        bp = b_ref[...]                     # (10, bias_w)
        ln = ln_ref[...]                    # (6, D)

        def attend(q2d, k2d, v2d, add_mask):
            """Multi-head attention with head AND batch folded into the KV axis.

            q2d: (Nq, D); k2d/v2d: (Nkv, D); add_mask: (Nq, H*Nkv) additive
            (0 keep / -1e9 blocked, block-diagonal over batch).  Lane-masking
            K/V per head makes the full-width contraction yield per-head scores
            and lands each head's context in its own lane block, so a single
            score matmul + single PV matmul replace the per-head loop/concat.
            """
            n_q = q2d.shape[0]
            n_kv = k2d.shape[0]
            k_all = (hm[:, None, :] * k2d[None, :, :]).reshape(n_heads * n_kv, D)
            v_all = (hm[:, None, :] * v2d[None, :, :]).reshape(n_heads * n_kv, D)
            s = jnp.einsum('qd,kd->qk', q2d, k_all,
                           preferred_element_type=jnp.float32) + add_mask
            s3 = s.reshape(n_q, n_heads, n_kv)          # segmented softmax per head
            m = jnp.max(s3, axis=-1, keepdims=True)
            e = jnp.exp(s3 - m)
            denom = jnp.sum(e, axis=-1, keepdims=True)
            p = (e / denom).reshape(n_q, n_heads * n_kv)   # exact divide (f32 parity)
            return jnp.dot(p, v_all, preferred_element_type=jnp.float32)

        # ---- self-attention -> dropout(id) -> residual -> norm1 ----
        q = jnp.dot(x2, w_attn_ref[0], preferred_element_type=jnp.float32) + bp[0:1, 0:D]
        k = jnp.dot(x2, w_attn_ref[1], preferred_element_type=jnp.float32) + bp[1:2, 0:D]
        v = jnp.dot(x2, w_attn_ref[2], preferred_element_type=jnp.float32) + bp[2:3, 0:D]
        ctx = attend(q, k, v, tmask_ref[...])
        sa_out = jnp.dot(ctx, w_attn_ref[3],
                         preferred_element_type=jnp.float32) + bp[3:4, 0:D]
        x2 = _layernorm(x2 + sa_out, ln[0:1, :], ln[1:2, :])

        # ---- cross-attention -> dropout(id) -> residual -> norm2 ----
        qc = jnp.dot(x2, w_attn_ref[4], preferred_element_type=jnp.float32) + bp[4:5, 0:D]
        kc = jnp.dot(mem2, w_attn_ref[5], preferred_element_type=jnp.float32) + bp[5:6, 0:D]
        vc = jnp.dot(mem2, w_attn_ref[6], preferred_element_type=jnp.float32) + bp[6:7, 0:D]
        ctx = attend(qc, kc, vc, smask_ref[...])
        ca_out = jnp.dot(ctx, w_attn_ref[7],
                         preferred_element_type=jnp.float32) + bp[7:8, 0:D]
        x2 = _layernorm(x2 + ca_out, ln[2:3, :], ln[3:4, :])

        # ---- feed-forward (linear -> ReLU -> linear) -> residual -> norm3 ----
        h1 = jnp.maximum(
            jnp.dot(x2, w_ff1_ref[...],
                    preferred_element_type=jnp.float32) + bp[8:9, 0:d_ff], 0.0)
        ff_out = jnp.dot(h1, w_ff2_ref[...],
                         preferred_element_type=jnp.float32) + bp[9:10, 0:D]
        out_ref[...] = _layernorm(x2 + ff_out, ln[4:5, :], ln[5:6, :])

    vmem = pl.BlockSpec(memory_space=pltpu.MemorySpace.VMEM)
    out2d = pl.pallas_call(
        kernel,
        out_shape=jax.ShapeDtypeStruct((B * S, D), jnp.float32),
        in_specs=[vmem] * 10,
        out_specs=vmem,
    )(x2d, mem2d, tgt_add, src_add, head_masks,
      w_attn, w_ff1, w_ff2, b_pack, ln_pack)

    return out2d.reshape(B, S, D)


# --------------------------------- params ------------------------------------ #
def init_params(key):
    """Deterministic synthetic parameters with the shapes implied by __init__."""
    ks = iter(jax.random.split(key, 32))

    def w(shape, scale=0.05):
        return (scale * jax.random.normal(next(ks), shape)).astype(jnp.float32)

    def b(n):
        return jnp.full((1, n), 0.01, jnp.float32)

    def attn():
        return {'wq': w((D_MODEL, D_MODEL)), 'bq': b(D_MODEL),
                'wk': w((D_MODEL, D_MODEL)), 'bk': b(D_MODEL),
                'wv': w((D_MODEL, D_MODEL)), 'bv': b(D_MODEL),
                'wo': w((D_MODEL, D_MODEL)), 'bo': b(D_MODEL)}

    ln = lambda: {'g': jnp.ones((1, D_MODEL), jnp.float32),
                  'b': jnp.zeros((1, D_MODEL), jnp.float32)}

    return {
        'sa': attn(),
        'ca': attn(),
        'ff': {'w1': w((D_MODEL, D_FF)), 'b1': b(D_FF),
               'w2': w((D_FF, D_MODEL)), 'b2': b(D_MODEL)},
        'ln1': ln(), 'ln2': ln(), 'ln3': ln(),
    }


if __name__ == "__main__":
    key = jax.random.PRNGKey(0)
    kx, km, kp = jax.random.split(key, 3)

    x = jax.random.normal(kx, (BATCH, S_TGT, D_MODEL), jnp.float32)
    memory = jax.random.normal(km, (BATCH, S_SRC, D_MODEL), jnp.float32)

    # causal target mask (1 = attend), full source mask
    tgt_mask = jnp.tril(jnp.ones((S_TGT, S_TGT), jnp.float32))
    src_mask = jnp.ones((S_TGT, S_SRC), jnp.float32)

    params = init_params(kp)

    out = transformer_decoder_layer(x, memory, tgt_mask, src_mask, params)
    out = jax.block_until_ready(out)

    assert out.shape == (BATCH, S_TGT, D_MODEL)
    assert bool(jnp.all(jnp.isfinite(out)))
    print("KERNEL_OK")
</pallas_src>

<mosaic_0001>
module attributes {stable_mosaic.version = 11 : i64} {
  func.func @kernel(%arg0: memref<16x32xf32, #tpu.memory_space<vmem>>, %arg1: memref<16x32xf32, #tpu.memory_space<vmem>>, %arg2: memref<16x64xf32, #tpu.memory_space<vmem>>, %arg3: memref<16x64xf32, #tpu.memory_space<vmem>>, %arg4: memref<4x32xf32, #tpu.memory_space<vmem>>, %arg5: memref<8x32x32xf32, #tpu.memory_space<vmem>>, %arg6: memref<32x64xf32, #tpu.memory_space<vmem>>, %arg7: memref<64x32xf32, #tpu.memory_space<vmem>>, %arg8: memref<10x64xf32, #tpu.memory_space<vmem>>, %arg9: memref<6x32xf32, #tpu.memory_space<vmem>>, %arg10: memref<16x32xf32, #tpu.memory_space<vmem>>) attributes {dimension_semantics = [], scalar_prefetch = 0 : i64, scratch_operands = 0 : i64, tpu.core_type = #tpu.core_type<tc>} {
    %c0 = arith.constant 0 : index
    %c0_0 = arith.constant 0 : index
    %0 = vector.load %arg0[%c0, %c0_0] : memref<16x32xf32, #tpu.memory_space<vmem>>, vector<16x32xf32>
    %c0_1 = arith.constant 0 : index
    %c0_2 = arith.constant 0 : index
    %1 = vector.load %arg1[%c0_1, %c0_2] : memref<16x32xf32, #tpu.memory_space<vmem>>, vector<16x32xf32>
    %c0_3 = arith.constant 0 : index
    %c0_4 = arith.constant 0 : index
    %2 = vector.load %arg4[%c0_3, %c0_4] : memref<4x32xf32, #tpu.memory_space<vmem>>, vector<4x32xf32>
    %c0_5 = arith.constant 0 : index
    %c0_6 = arith.constant 0 : index
    %3 = vector.load %arg8[%c0_5, %c0_6] : memref<10x64xf32, #tpu.memory_space<vmem>>, vector<10x64xf32>
    %c0_7 = arith.constant 0 : index
    %c0_8 = arith.constant 0 : index
    %4 = vector.load %arg9[%c0_7, %c0_8] : memref<6x32xf32, #tpu.memory_space<vmem>>, vector<6x32xf32>
    %c0_9 = arith.constant 0 : index
    %c0_10 = arith.constant 0 : index
    %c0_11 = arith.constant 0 : index
    %5 = vector.load %arg5[%c0_9, %c0_10, %c0_11] : memref<8x32x32xf32, #tpu.memory_space<vmem>>, vector<1x32x32xf32>
    %6 = vector.shape_cast %5 : vector<1x32x32xf32> to vector<32x32xf32>
    %cst = arith.constant dense<0.000000e+00> : vector<16x32xf32>
    %7 = tpu.matmul %0, %6, %cst {dimension_numbers = #tpu.dot_dimension_numbers<[1], [0], [0], [1], [0, 0, 1, 1], [], []>} : vector<16x32xf32>, vector<32x32xf32>, vector<16x32xf32> -> vector<16x32xf32>
    %8 = vector.extract_strided_slice %3 {offsets = [0, 0], sizes = [1, 32], strides = [1, 1]} : vector<10x64xf32> to vector<1x32xf32>
    %9 = vector.broadcast %8 : vector<1x32xf32> to vector<16x32xf32>
    %10 = arith.addf %7, %9 : vector<16x32xf32>
    %c1 = arith.constant 1 : index
    %c0_12 = arith.constant 0 : index
    %c0_13 = arith.constant 0 : index
    %11 = vector.load %arg5[%c1, %c0_12, %c0_13] : memref<8x32x32xf32, #tpu.memory_space<vmem>>, vector<1x32x32xf32>
    %12 = vector.shape_cast %11 : vector<1x32x32xf32> to vector<32x32xf32>
    %cst_14 = arith.constant dense<0.000000e+00> : vector<16x32xf32>
    %13 = tpu.matmul %0, %12, %cst_14 {dimension_numbers = #tpu.dot_dimension_numbers<[1], [0], [0], [1], [0, 0, 1, 1], [], []>} : vector<16x32xf32>, vector<32x32xf32>, vector<16x32xf32> -> vector<16x32xf32>
    %14 = vector.extract_strided_slice %3 {offsets = [1, 0], sizes = [1, 32], strides = [1, 1]} : vector<10x64xf32> to vector<1x32xf32>
    %15 = vector.broadcast %14 : vector<1x32xf32> to vector<16x32xf32>
    %16 = arith.addf %13, %15 : vector<16x32xf32>
    %c2 = arith.constant 2 : index
    %c0_15 = arith.constant 0 : index
    %c0_16 = arith.constant 0 : index
    %17 = vector.load %arg5[%c2, %c0_15, %c0_16] : memref<8x32x32xf32, #tpu.memory_space<vmem>>, vector<1x32x32xf32>
    %18 = vector.shape_cast %17 : vector<1x32x32xf32> to vector<32x32xf32>
    %cst_17 = arith.constant dense<0.000000e+00> : vector<16x32xf32>
    %19 = tpu.matmul %0, %18, %cst_17 {dimension_numbers = #tpu.dot_dimension_numbers<[1], [0], [0], [1], [0, 0, 1, 1], [], []>} : vector<16x32xf32>, vector<32x32xf32>, vector<16x32xf32> -> vector<16x32xf32>
    %20 = vector.extract_strided_slice %3 {offsets = [2, 0], sizes = [1, 32], strides = [1, 1]} : vector<10x64xf32> to vector<1x32xf32>
    %21 = vector.broadcast %20 : vector<1x32xf32> to vector<16x32xf32>
    %22 = arith.addf %19, %21 : vector<16x32xf32>
    %c0_18 = arith.constant 0 : index
    %c0_19 = arith.constant 0 : index
    %23 = vector.load %arg2[%c0_18, %c0_19] : memref<16x64xf32, #tpu.memory_space<vmem>>, vector<16x64xf32>
    %24 = vector.shape_cast %2 : vector<4x32xf32> to vector<4x1x32xf32>
    %25 = vector.shape_cast %16 : vector<16x32xf32> to vector<1x16x32xf32>
    %26 = vector.broadcast %24 : vector<4x1x32xf32> to vector<4x16x32xf32>
    %27 = vector.broadcast %25 : vector<1x16x32xf32> to vector<4x16x32xf32>
    %28 = arith.mulf %26, %27 : vector<4x16x32xf32>
    %29 = vector.shape_cast %28 : vector<4x16x32xf32> to vector<64x32xf32>
    %30 = vector.shape_cast %2 : vector<4x32xf32> to vector<4x1x32xf32>
    %31 = vector.shape_cast %22 : vector<16x32xf32> to vector<1x16x32xf32>
    %32 = vector.broadcast %30 : vector<4x1x32xf32> to vector<4x16x32xf32>
    %33 = vector.broadcast %31 : vector<1x16x32xf32> to vector<4x16x32xf32>
    %34 = arith.mulf %32, %33 : vector<4x16x32xf32>
    %35 = vector.shape_cast %34 : vector<4x16x32xf32> to vector<64x32xf32>
    "tpu.trace_start"() <{level = 10 : i32, message = "qd,kd->qk"}> : () -> ()
    %cst_20 = arith.constant dense<0.000000e+00> : vector<16x64xf32>
    %36 = tpu.matmul %10, %29, %cst_20 {dimension_numbers = #tpu.dot_dimension_numbers<[1], [1], [0], [0], [0, 0, 1, 0], [], []>} : vector<16x32xf32>, vector<64x32xf32>, vector<16x64xf32> -> vector<16x64xf32>
    "tpu.trace_stop"() : () -> ()
    %37 = arith.addf %36, %23 : vector<16x64xf32>
    %38 = vector.shape_cast %37 : vector<16x64xf32> to vector<16x4x16xf32>
    %cst_21 = arith.constant dense<0xFF800000> : vector<16x4xf32>
    %39 = vector.multi_reduction <maximumf>, %38, %cst_21 [2] : vector<16x4x16xf32> to vector<16x4xf32>
    %40 = vector.shape_cast %39 : vector<16x4xf32> to vector<16x4x1xf32>
    %41 = vector.broadcast %40 : vector<16x4x1xf32> to vector<16x4x16xf32>
    %42 = arith.subf %38, %41 : vector<16x4x16xf32>
    %43 = math.exp %42 : vector<16x4x16xf32>
    %cst_22 = arith.constant dense<0.000000e+00> : vector<16x4xf32>
    %44 = vector.multi_reduction <add>, %43, %cst_22 [2] : vector<16x4x16xf32> to vector<16x4xf32>
    %45 = vector.shape_cast %44 : vector<16x4xf32> to vector<16x4x1xf32>
    %46 = vector.broadcast %45 : vector<16x4x1xf32> to vector<16x4x16xf32>
    %47 = arith.divf %43, %46 : vector<16x4x16xf32>
    %48 = vector.shape_cast %47 : vector<16x4x16xf32> to vector<16x64xf32>
    %cst_23 = arith.constant dense<0.000000e+00> : vector<16x32xf32>
    %49 = tpu.matmul %48, %35, %cst_23 {dimension_numbers = #tpu.dot_dimension_numbers<[1], [0], [0], [1], [0, 0, 1, 1], [], []>} : vector<16x64xf32>, vector<64x32xf32>, vector<16x32xf32> -> vector<16x32xf32>
    %c3 = arith.constant 3 : index
    %c0_24 = arith.constant 0 : index
    %c0_25 = arith.constant 0 : index
    %50 = vector.load %arg5[%c3, %c0_24, %c0_25] : memref<8x32x32xf32, #tpu.memory_space<vmem>>, vector<1x32x32xf32>
    %51 = vector.shape_cast %50 : vector<1x32x32xf32> to vector<32x32xf32>
    %cst_26 = arith.constant dense<0.000000e+00> : vector<16x32xf32>
    %52 = tpu.matmul %49, %51, %cst_26 {dimension_numbers = #tpu.dot_dimension_numbers<[1], [0], [0], [1], [0, 0, 1, 1], [], []>} : vector<16x32xf32>, vector<32x32xf32>, vector<16x32xf32> -> vector<16x32xf32>
    %53 = vector.extract_strided_slice %3 {offsets = [3, 0], sizes = [1, 32], strides = [1, 1]} : vector<10x64xf32> to vector<1x32xf32>
    %54 = vector.broadcast %53 : vector<1x32xf32> to vector<16x32xf32>
    %55 = arith.addf %52, %54 : vector<16x32xf32>
    %56 = arith.addf %0, %55 : vector<16x32xf32>
    %57 = vector.extract_strided_slice %4 {offsets = [0, 0], sizes = [1, 32], strides = [1, 1]} : vector<6x32xf32> to vector<1x32xf32>
    %58 = vector.extract_strided_slice %4 {offsets = [1, 0], sizes = [1, 32], strides = [1, 1]} : vector<6x32xf32> to vector<1x32xf32>
    %cst_27 = arith.constant dense<0.000000e+00> : vector<16xf32>
    %59 = vector.multi_reduction <add>, %56, %cst_27 [1] : vector<16x32xf32> to vector<16xf32>
    %60 = vector.shape_cast %59 : vector<16xf32> to vector<16x1xf32>
    %cst_28 = arith.constant 3.200000e+01 : f32
    %61 = vector.broadcast %cst_28 : f32 to vector<16x1xf32>
    %62 = arith.divf %60, %61 : vector<16x1xf32>
    %63 = vector.broadcast %62 : vector<16x1xf32> to vector<16x32xf32>
    %64 = arith.subf %56, %63 : vector<16x32xf32>
    %65 = arith.mulf %64, %64 : vector<16x32xf32>
    %cst_29 = arith.constant dense<0.000000e+00> : vector<16xf32>
    %66 = vector.multi_reduction <add>, %65, %cst_29 [1] : vector<16x32xf32> to vector<16xf32>
    %67 = vector.shape_cast %66 : vector<16xf32> to vector<16x1xf32>
    %cst_30 = arith.constant 3.200000e+01 : f32
    %68 = vector.broadcast %cst_30 : f32 to vector<16x1xf32>
    %69 = arith.divf %67, %68 : vector<16x1xf32>
    %cst_31 = arith.constant 9.99999974E-6 : f32
    %70 = vector.broadcast %cst_31 : f32 to vector<16x1xf32>
    %71 = arith.addf %69, %70 : vector<16x1xf32>
    %72 = math.rsqrt %71 : vector<16x1xf32>
    %73 = vector.broadcast %72 : vector<16x1xf32> to vector<16x32xf32>
    %74 = arith.mulf %64, %73 : vector<16x32xf32>
    %75 = vector.broadcast %57 : vector<1x32xf32> to vector<16x32xf32>
    %76 = arith.mulf %74, %75 : vector<16x32xf32>
    %77 = vector.broadcast %58 : vector<1x32xf32> to vector<16x32xf32>
    %78 = arith.addf %76, %77 : vector<16x32xf32>
    %c4 = arith.constant 4 : index
    %c0_32 = arith.constant 0 : index
    %c0_33 = arith.constant 0 : index
    %79 = vector.load %arg5[%c4, %c0_32, %c0_33] : memref<8x32x32xf32, #tpu.memory_space<vmem>>, vector<1x32x32xf32>
    %80 = vector.shape_cast %79 : vector<1x32x32xf32> to vector<32x32xf32>
    %cst_34 = arith.constant dense<0.000000e+00> : vector<16x32xf32>
    %81 = tpu.matmul %78, %80, %cst_34 {dimension_numbers = #tpu.dot_dimension_numbers<[1], [0], [0], [1], [0, 0, 1, 1], [], []>} : vector<16x32xf32>, vector<32x32xf32>, vector<16x32xf32> -> vector<16x32xf32>
    %82 = vector.extract_strided_slice %3 {offsets = [4, 0], sizes = [1, 32], strides = [1, 1]} : vector<10x64xf32> to vector<1x32xf32>
    %83 = vector.broadcast %82 : vector<1x32xf32> to vector<16x32xf32>
    %84 = arith.addf %81, %83 : vector<16x32xf32>
    %c5 = arith.constant 5 : index
    %c0_35 = arith.constant 0 : index
    %c0_36 = arith.constant 0 : index
    %85 = vector.load %arg5[%c5, %c0_35, %c0_36] : memref<8x32x32xf32, #tpu.memory_space<vmem>>, vector<1x32x32xf32>
    %86 = vector.shape_cast %85 : vector<1x32x32xf32> to vector<32x32xf32>
    %cst_37 = arith.constant dense<0.000000e+00> : vector<16x32xf32>
    %87 = tpu.matmul %1, %86, %cst_37 {dimension_numbers = #tpu.dot_dimension_numbers<[1], [0], [0], [1], [0, 0, 1, 1], [], []>} : vector<16x32xf32>, vector<32x32xf32>, vector<16x32xf32> -> vector<16x32xf32>
    %88 = vector.extract_strided_slice %3 {offsets = [5, 0], sizes = [1, 32], strides = [1, 1]} : vector<10x64xf32> to vector<1x32xf32>
    %89 = vector.broadcast %88 : vector<1x32xf32> to vector<16x32xf32>
    %90 = arith.addf %87, %89 : vector<16x32xf32>
    %c6 = arith.constant 6 : index
    %c0_38 = arith.constant 0 : index
    %c0_39 = arith.constant 0 : index
    %91 = vector.load %arg5[%c6, %c0_38, %c0_39] : memref<8x32x32xf32, #tpu.memory_space<vmem>>, vector<1x32x32xf32>
    %92 = vector.shape_cast %91 : vector<1x32x32xf32> to vector<32x32xf32>
    %cst_40 = arith.constant dense<0.000000e+00> : vector<16x32xf32>
    %93 = tpu.matmul %1, %92, %cst_40 {dimension_numbers = #tpu.dot_dimension_numbers<[1], [0], [0], [1], [0, 0, 1, 1], [], []>} : vector<16x32xf32>, vector<32x32xf32>, vector<16x32xf32> -> vector<16x32xf32>
    %94 = vector.extract_strided_slice %3 {offsets = [6, 0], sizes = [1, 32], strides = [1, 1]} : vector<10x64xf32> to vector<1x32xf32>
    %95 = vector.broadcast %94 : vector<1x32xf32> to vector<16x32xf32>
    %96 = arith.addf %93, %95 : vector<16x32xf32>
    %c0_41 = arith.constant 0 : index
    %c0_42 = arith.constant 0 : index
    %97 = vector.load %arg3[%c0_41, %c0_42] : memref<16x64xf32, #tpu.memory_space<vmem>>, vector<16x64xf32>
    %98 = vector.shape_cast %2 : vector<4x32xf32> to vector<4x1x32xf32>
    %99 = vector.shape_cast %90 : vector<16x32xf32> to vector<1x16x32xf32>
    %100 = vector.broadcast %98 : vector<4x1x32xf32> to vector<4x16x32xf32>
    %101 = vector.broadcast %99 : vector<1x16x32xf32> to vector<4x16x32xf32>
    %102 = arith.mulf %100, %101 : vector<4x16x32xf32>
    %103 = vector.shape_cast %102 : vector<4x16x32xf32> to vector<64x32xf32>
    %104 = vector.shape_cast %2 : vector<4x32xf32> to vector<4x1x32xf32>
    %105 = vector.shape_cast %96 : vector<16x32xf32> to vector<1x16x32xf32>
    %106 = vector.broadcast %104 : vector<4x1x32xf32> to vector<4x16x32xf32>
    %107 = vector.broadcast %105 : vector<1x16x32xf32> to vector<4x16x32xf32>
    %108 = arith.mulf %106, %107 : vector<4x16x32xf32>
    %109 = vector.shape_cast %108 : vector<4x16x32xf32> to vector<64x32xf32>
    "tpu.trace_start"() <{level = 10 : i32, message = "qd,kd->qk"}> : () -> ()
    %cst_43 = arith.constant dense<0.000000e+00> : vector<16x64xf32>
    %110 = tpu.matmul %84, %103, %cst_43 {dimension_numbers = #tpu.dot_dimension_numbers<[1], [1], [0], [0], [0, 0, 1, 0], [], []>} : vector<16x32xf32>, vector<64x32xf32>, vector<16x64xf32> -> vector<16x64xf32>
    "tpu.trace_stop"() : () -> ()
    %111 = arith.addf %110, %97 : vector<16x64xf32>
    %112 = vector.shape_cast %111 : vector<16x64xf32> to vector<16x4x16xf32>
    %cst_44 = arith.constant dense<0xFF800000> : vector<16x4xf32>
    %113 = vector.multi_reduction <maximumf>, %112, %cst_44 [2] : vector<16x4x16xf32> to vector<16x4xf32>
    %114 = vector.shape_cast %113 : vector<16x4xf32> to vector<16x4x1xf32>
    %115 = vector.broadcast %114 : vector<16x4x1xf32> to vector<16x4x16xf32>
    %116 = arith.subf %112, %115 : vector<16x4x16xf32>
    %117 = math.exp %116 : vector<16x4x16xf32>
    %cst_45 = arith.constant dense<0.000000e+00> : vector<16x4xf32>
    %118 = vector.multi_reduction <add>, %117, %cst_45 [2] : vector<16x4x16xf32> to vector<16x4xf32>
    %119 = vector.shape_cast %118 : vector<16x4xf32> to vector<16x4x1xf32>
    %120 = vector.broadcast %119 : vector<16x4x1xf32> to vector<16x4x16xf32>
    %121 = arith.divf %117, %120 : vector<16x4x16xf32>
    %122 = vector.shape_cast %121 : vector<16x4x16xf32> to vector<16x64xf32>
    %cst_46 = arith.constant dense<0.000000e+00> : vector<16x32xf32>
    %123 = tpu.matmul %122, %109, %cst_46 {dimension_numbers = #tpu.dot_dimension_numbers<[1], [0], [0], [1], [0, 0, 1, 1], [], []>} : vector<16x64xf32>, vector<64x32xf32>, vector<16x32xf32> -> vector<16x32xf32>
    %c7 = arith.constant 7 : index
    %c0_47 = arith.constant 0 : index
    %c0_48 = arith.constant 0 : index
    %124 = vector.load %arg5[%c7, %c0_47, %c0_48] : memref<8x32x32xf32, #tpu.memory_space<vmem>>, vector<1x32x32xf32>
    %125 = vector.shape_cast %124 : vector<1x32x32xf32> to vector<32x32xf32>
    %cst_49 = arith.constant dense<0.000000e+00> : vector<16x32xf32>
    %126 = tpu.matmul %123, %125, %cst_49 {dimension_numbers = #tpu.dot_dimension_numbers<[1], [0], [0], [1], [0, 0, 1, 1], [], []>} : vector<16x32xf32>, vector<32x32xf32>, vector<16x32xf32> -> vector<16x32xf32>
    %127 = vector.extract_strided_slice %3 {offsets = [7, 0], sizes = [1, 32], strides = [1, 1]} : vector<10x64xf32> to vector<1x32xf32>
    %128 = vector.broadcast %127 : vector<1x32xf32> to vector<16x32xf32>
    %129 = arith.addf %126, %128 : vector<16x32xf32>
    %130 = arith.addf %78, %129 : vector<16x32xf32>
    %131 = vector.extract_strided_slice %4 {offsets = [2, 0], sizes = [1, 32], strides = [1, 1]} : vector<6x32xf32> to vector<1x32xf32>
    %132 = vector.extract_strided_slice %4 {offsets = [3, 0], sizes = [1, 32], strides = [1, 1]} : vector<6x32xf32> to vector<1x32xf32>
    %cst_50 = arith.constant dense<0.000000e+00> : vector<16xf32>
    %133 = vector.multi_reduction <add>, %130, %cst_50 [1] : vector<16x32xf32> to vector<16xf32>
    %134 = vector.shape_cast %133 : vector<16xf32> to vector<16x1xf32>
    %cst_51 = arith.constant 3.200000e+01 : f32
    %135 = vector.broadcast %cst_51 : f32 to vector<16x1xf32>
    %136 = arith.divf %134, %135 : vector<16x1xf32>
    %137 = vector.broadcast %136 : vector<16x1xf32> to vector<16x32xf32>
    %138 = arith.subf %130, %137 : vector<16x32xf32>
    %139 = arith.mulf %138, %138 : vector<16x32xf32>
    %cst_52 = arith.constant dense<0.000000e+00> : vector<16xf32>
    %140 = vector.multi_reduction <add>, %139, %cst_52 [1] : vector<16x32xf32> to vector<16xf32>
    %141 = vector.shape_cast %140 : vector<16xf32> to vector<16x1xf32>
    %cst_53 = arith.constant 3.200000e+01 : f32
    %142 = vector.broadcast %cst_53 : f32 to vector<16x1xf32>
    %143 = arith.divf %141, %142 : vector<16x1xf32>
    %cst_54 = arith.constant 9.99999974E-6 : f32
    %144 = vector.broadcast %cst_54 : f32 to vector<16x1xf32>
    %145 = arith.addf %143, %144 : vector<16x1xf32>
    %146 = math.rsqrt %145 : vector<16x1xf32>
    %147 = vector.broadcast %146 : vector<16x1xf32> to vector<16x32xf32>
    %148 = arith.mulf %138, %147 : vector<16x32xf32>
    %149 = vector.broadcast %131 : vector<1x32xf32> to vector<16x32xf32>
    %150 = arith.mulf %148, %149 : vector<16x32xf32>
    %151 = vector.broadcast %132 : vector<1x32xf32> to vector<16x32xf32>
    %152 = arith.addf %150, %151 : vector<16x32xf32>
    %c0_55 = arith.constant 0 : index
    %c0_56 = arith.constant 0 : index
    %153 = vector.load %arg6[%c0_55, %c0_56] : memref<32x64xf32, #tpu.memory_space<vmem>>, vector<32x64xf32>
    %cst_57 = arith.constant dense<0.000000e+00> : vector<16x64xf32>
    %154 = tpu.matmul %152, %153, %cst_57 {dimension_numbers = #tpu.dot_dimension_numbers<[1], [0], [0], [1], [0, 0, 1, 1], [], []>} : vector<16x32xf32>, vector<32x64xf32>, vector<16x64xf32> -> vector<16x64xf32>
    %155 = vector.extract_strided_slice %3 {offsets = [8, 0], sizes = [1, 64], strides = [1, 1]} : vector<10x64xf32> to vector<1x64xf32>
    %156 = vector.broadcast %155 : vector<1x64xf32> to vector<16x64xf32>
    %157 = arith.addf %154, %156 : vector<16x64xf32>
    %cst_58 = arith.constant 0.000000e+00 : f32
    %158 = vector.broadcast %cst_58 : f32 to vector<16x64xf32>
    %159 = arith.maximumf %157, %158 : vector<16x64xf32>
    %c0_59 = arith.constant 0 : index
    %c0_60 = arith.constant 0 : index
    %160 = vector.load %arg7[%c0_59, %c0_60] : memref<64x32xf32, #tpu.memory_space<vmem>>, vector<64x32xf32>
    %cst_61 = arith.constant dense<0.000000e+00> : vector<16x32xf32>
    %161 = tpu.matmul %159, %160, %cst_61 {dimension_numbers = #tpu.dot_dimension_numbers<[1], [0], [0], [1], [0, 0, 1, 1], [], []>} : vector<16x64xf32>, vector<64x32xf32>, vector<16x32xf32> -> vector<16x32xf32>
    %162 = vector.extract_strided_slice %3 {offsets = [9, 0], sizes = [1, 32], strides = [1, 1]} : vector<10x64xf32> to vector<1x32xf32>
    %163 = vector.broadcast %162 : vector<1x32xf32> to vector<16x32xf32>
    %164 = arith.addf %161, %163 : vector<16x32xf32>
    %165 = arith.addf %152, %164 : vector<16x32xf32>
    %166 = vector.extract_strided_slice %4 {offsets = [4, 0], sizes = [1, 32], strides = [1, 1]} : vector<6x32xf32> to vector<1x32xf32>
    %167 = vector.extract_strided_slice %4 {offsets = [5, 0], sizes = [1, 32], strides = [1, 1]} : vector<6x32xf32> to vector<1x32xf32>
    %cst_62 = arith.constant dense<0.000000e+00> : vector<16xf32>
    %168 = vector.multi_reduction <add>, %165, %cst_62 [1] : vector<16x32xf32> to vector<16xf32>
    %169 = vector.shape_cast %168 : vector<16xf32> to vector<16x1xf32>
    %cst_63 = arith.constant 3.200000e+01 : f32
    %170 = vector.broadcast %cst_63 : f32 to vector<16x1xf32>
    %171 = arith.divf %169, %170 : vector<16x1xf32>
    %172 = vector.broadcast %171 : vector<16x1xf32> to vector<16x32xf32>
    %173 = arith.subf %165, %172 : vector<16x32xf32>
    %174 = arith.mulf %173, %173 : vector<16x32xf32>
    %cst_64 = arith.constant dense<0.000000e+00> : vector<16xf32>
    %175 = vector.multi_reduction <add>, %174, %cst_64 [1] : vector<16x32xf32> to vector<16xf32>
    %176 = vector.shape_cast %175 : vector<16xf32> to vector<16x1xf32>
    %cst_65 = arith.constant 3.200000e+01 : f32
    %177 = vector.broadcast %cst_65 : f32 to vector<16x1xf32>
    %178 = arith.divf %176, %177 : vector<16x1xf32>
    %cst_66 = arith.constant 9.99999974E-6 : f32
    %179 = vector.broadcast %cst_66 : f32 to vector<16x1xf32>
    %180 = arith.addf %178, %179 : vector<16x1xf32>
    %181 = math.rsqrt %180 : vector<16x1xf32>
    %182 = vector.broadcast %181 : vector<16x1xf32> to vector<16x32xf32>
    %183 = arith.mulf %173, %182 : vector<16x32xf32>
    %184 = vector.broadcast %166 : vector<1x32xf32> to vector<16x32xf32>
    %185 = arith.mulf %183, %184 : vector<16x32xf32>
    %186 = vector.broadcast %167 : vector<1x32xf32> to vector<16x32xf32>
    %187 = arith.addf %185, %186 : vector<16x32xf32>
    %c0_67 = arith.constant 0 : index
    %c0_68 = arith.constant 0 : index
    %188 = vector.load %arg10[%c0_67, %c0_68] : memref<16x32xf32, #tpu.memory_space<vmem>>, vector<16x32xf32>
    tpu.vector_store %arg10[%c0_67, %c0_68], %187 {strides = array<i32>} : memref<16x32xf32, #tpu.memory_space<vmem>>, vector<16x32xf32>,
    return
  }
}

</mosaic_0001>

<llo_original>
// kernel: tpu_custom_call.1
$region0: #{tpu_custom_call.1}
  #allocation0 [shape = 'u32[]', space=smem, size = 0x4, offset = 0x4, fixed_abs, tag = 'smem constant byte address 0x4 - core index']
  #allocation1 [shape = 'u32[72,128]{1,0:T(1,128)}', space=vmem, size = 0x9000, scoped, tag = 'internal scratch']
  %s0 = inlined_call_operand.vmem [shape: f32[16,32], index: 0, kind: input, shape index: {}]
  %s1 = inlined_call_operand.vmem [shape: f32[16,32], index: 1, kind: input, shape index: {}]
  %s2 = inlined_call_operand.vmem [shape: f32[16,64], index: 2, kind: input, shape index: {}]
  %s3 = inlined_call_operand.vmem [shape: f32[16,64], index: 3, kind: input, shape index: {}]
  %s4 = inlined_call_operand.hbm [shape: f32[4,32], index: 4, kind: input, shape index: {}]
  %s5 = inlined_call_operand.hbm [shape: f32[8,32,32], index: 5, kind: input, shape index: {}]
  %s6 = inlined_call_operand.vmem [shape: f32[32,64], index: 6, kind: input, shape index: {}]
  %s7 = inlined_call_operand.vmem [shape: f32[64,32], index: 7, kind: input, shape index: {}]
  %s8 = inlined_call_operand.hbm [shape: f32[10,64], index: 8, kind: input, shape index: {}]
  %s9 = inlined_call_operand.hbm [shape: f32[6,32], index: 9, kind: input, shape index: {}]
  %s10 = inlined_call_operand.hbm [shape: f32[16,32], index: 10, kind: output, shape index: {}]
  %s11 = sld [smem:[#allocation0]]
  $region66: #{tpu_custom_call.1} parent=0
    _
  %s13 = ssub.s32 1, %s11
  %s14 = scalar_select 0, %s13, %s11
  $region1: #{tpu_custom_call.1} parent=0
    #allocation2 [shape = 'u8[2048]{0}', space=vmem, size = 0x800, scoped, tag = 'input window, operand 4, single buffered']
    #allocation3 [shape = 's32[1]{0}', space=sflag, size = 0x4, scoped, tag = 'scoped memory for tpu_custom_call.1']
    #allocation4 [shape = 's32[1]{0}', space=sflag, size = 0x4, scoped, tag = 'scoped memory for tpu_custom_call.1']
    #allocation5 [shape = 'u8[131072]{0}', space=vmem, size = 0x20000, scoped, tag = 'input window, operand 5, single buffered']
    #allocation6 [shape = 's32[1]{0}', space=sflag, size = 0x4, scoped, tag = 'scoped memory for tpu_custom_call.1']
    #allocation7 [shape = 'u8[8192]{0}', space=vmem, size = 0x2000, scoped, tag = 'input window, operand 8, single buffered']
    #allocation8 [shape = 'u8[4096]{0}', space=vmem, size = 0x1000, scoped, tag = 'input window, operand 9, single buffered']
    #allocation9 [shape = 's32[1]{0}', space=sflag, size = 0x4, scoped, tag = 'scoped memory for tpu_custom_call.1']
    #allocation10 [shape = 'u8[8192]{0}', space=vmem, size = 0x2000, scoped, tag = 'output window, operand 0, single buffered']
    %15 = vsyncpa [#allocation3], 0
    %16 = vsyncpa [#allocation6], 0
    %17 = vsyncpa [#allocation9], 0
    %18 = vsyncpa [#allocation4], 0
    // Predicated region
    $region2: #{tpu_custom_call.1} parent=1 // pred_check
      _
    $region3: #{tpu_custom_call.1} parent=1 // pred_check_branch
      %20 = sbr.rel (0) target = $region5
    $region4: #{tpu_custom_call.1} parent=1 // pred_region
      _
    $region5: #{tpu_custom_call.1} parent=1 // pred_fallthru
      _
    // Predicated region
    $region6: #{tpu_custom_call.1} parent=1 // pred_check
      _
    $region7: #{tpu_custom_call.1} parent=1 // pred_check_branch
      %22 = sbr.rel (0) target = $region9
    $region8: #{tpu_custom_call.1} parent=1 // pred_region
      _
    $region9: #{tpu_custom_call.1} parent=1 // pred_fallthru
      _
    // Predicated region
    $region10: #{tpu_custom_call.1} parent=1 // pred_check
      _
    $region11: #{tpu_custom_call.1} parent=1 // pred_check_branch
      %24 = sbr.rel (0) target = $region13
    $region12: #{tpu_custom_call.1} parent=1 // pred_region
      _
    $region13: #{tpu_custom_call.1} parent=1 // pred_fallthru
      _
    // Predicated region
    $region14: #{tpu_custom_call.1} parent=1 // pred_check
      _
    $region15: #{tpu_custom_call.1} parent=1 // pred_check_branch
      %26 = sbr.rel (0) target = $region17
    $region16: #{tpu_custom_call.1} parent=1 // pred_region
      _
    $region17: #{tpu_custom_call.1} parent=1 // pred_fallthru
      _
    // Predicated region
    $region18: #{tpu_custom_call.1} parent=1 // pred_check
      _
    $region19: #{tpu_custom_call.1} parent=1 // pred_check_branch
      %28 = sbr.rel (0) target = $region21
    $region20: #{tpu_custom_call.1} parent=1 // pred_region
      %30 = vsyncadd [#allocation3], 0
      %s32 = sshll.u32 %s4, 4
      %s33 = int_to_ptr.hbm [resolvable:$true] %s32
      %s34 = sshll.u32 [#allocation2], 4
      %s35 = int_to_ptr.vmem [resolvable:$true] %s34
      %37 = dma.hbm_to_vmem [thread:$0]  %s33, 64, %s35, [#allocation3]
    $region21: #{tpu_custom_call.1} parent=1 // pred_fallthru
      _
    // Predicated region
    $region22: #{tpu_custom_call.1} parent=1 // pred_check
      _
    $region23: #{tpu_custom_call.1} parent=1 // pred_check_branch
      %39 = sbr.rel (0) target = $region25
    $region24: #{tpu_custom_call.1} parent=1 // pred_region
      %41 = vsyncadd [#allocation6], 0
      %s42 = sshll.u32 %s5, 4
      %s43 = int_to_ptr.hbm [resolvable:$true] %s42
      %s44 = sshll.u32 [#allocation5], 4
      %s45 = int_to_ptr.vmem [resolvable:$true] %s44
      %50 = dma.hbm_to_vmem [thread:$0]  %s43, 4096, %s45, [#allocation6], 128, 128, 8
    $region25: #{tpu_custom_call.1} parent=1 // pred_fallthru
      _
    // Predicated region
    $region26: #{tpu_custom_call.1} parent=1 // pred_check
      _
    $region27: #{tpu_custom_call.1} parent=1 // pred_check_branch
      %52 = sbr.rel (0) target = $region29
    $region28: #{tpu_custom_call.1} parent=1 // pred_region
      _
    $region29: #{tpu_custom_call.1} parent=1 // pred_fallthru
      _
    // Predicated region
    $region30: #{tpu_custom_call.1} parent=1 // pred_check
      _
    $region31: #{tpu_custom_call.1} parent=1 // pred_check_branch
      %54 = sbr.rel (0) target = $region33
    $region32: #{tpu_custom_call.1} parent=1 // pred_region
      _
    $region33: #{tpu_custom_call.1} parent=1 // pred_fallthru
      _
    // Predicated region
    $region34: #{tpu_custom_call.1} parent=1 // pred_check
      _
    $region35: #{tpu_custom_call.1} parent=1 // pred_check_branch
      %56 = sbr.rel (0) target = $region37
    $region36: #{tpu_custom_call.1} parent=1 // pred_region
      %58 = vsyncadd [#allocation6], 0
      %s59 = sshll.u32 %s8, 4
      %s60 = int_to_ptr.hbm [resolvable:$true] %s59
      %s61 = sshll.u32 [#allocation7], 4
      %s62 = int_to_ptr.vmem [resolvable:$true] %s61
      %67 = dma.hbm_to_vmem [thread:$0]  %s60, 256, %s62, [#allocation6], 128, 128, 8
    $region37: #{tpu_custom_call.1} parent=1 // pred_fallthru
      _
    // Predicated region
    $region38: #{tpu_custom_call.1} parent=1 // pred_check
      _
    $region39: #{tpu_custom_call.1} parent=1 // pred_check_branch
      %69 = sbr.rel (0) target = $region41
    $region40: #{tpu_custom_call.1} parent=1 // pred_region
      %71 = vsyncadd [#allocation9], 0
      %s73 = sshll.u32 %s9, 4
      %s74 = int_to_ptr.hbm [resolvable:$true] %s73
      %s75 = sshll.u32 [#allocation8], 4
      %s76 = int_to_ptr.vmem [resolvable:$true] %s75
      %78 = dma.hbm_to_vmem [thread:$0]  %s74, 128, %s76, [#allocation9]
    $region41: #{tpu_custom_call.1} parent=1 // pred_fallthru
      _
    // Predicated region
    $region42: #{tpu_custom_call.1} parent=1 // pred_check
      _
    $region43: #{tpu_custom_call.1} parent=1 // pred_check_branch
      %80 = sbr.rel (0) target = $region45
    $region44: #{tpu_custom_call.1} parent=1 // pred_region
      %82 = dma.done [#allocation3], 64
    $region45: #{tpu_custom_call.1} parent=1 // pred_fallthru
      _
    // Predicated region
    $region46: #{tpu_custom_call.1} parent=1 // pred_check
      _
    $region47: #{tpu_custom_call.1} parent=1 // pred_check_branch
      %84 = sbr.rel (0) target = $region49
    $region48: #{tpu_custom_call.1} parent=1 // pred_region
      %86 = dma.done [#allocation6], 4096
    $region49: #{tpu_custom_call.1} parent=1 // pred_fallthru
      _
    // Predicated region
    $region50: #{tpu_custom_call.1} parent=1 // pred_check
      _
    $region51: #{tpu_custom_call.1} parent=1 // pred_check_branch
      %88 = sbr.rel (0) target = $region53
    $region52: #{tpu_custom_call.1} parent=1 // pred_region
      %90 = dma.done [#allocation6], 256
    $region53: #{tpu_custom_call.1} parent=1 // pred_fallthru
      _
    // Predicated region
    $region54: #{tpu_custom_call.1} parent=1 // pred_check
      _
    $region55: #{tpu_custom_call.1} parent=1 // pred_check_branch
      %92 = sbr.rel (0) target = $region57
    $region56: #{tpu_custom_call.1} parent=1 // pred_region
      %94 = dma.done [#allocation9], 128
    $region57: #{tpu_custom_call.1} parent=1 // pred_fallthru
      _
    %v95 = vld [vmem:[%s0] sm:$0xff]
    %v96 = vld [vmem:[%s0 + $0x8] sm:$0xff]
    %v97 = vld [vmem:[%s1] sm:$0xff]
    %v98 = vld [vmem:[%s1 + $0x8] sm:$0xff]
    %v99 = vld [vmem:[#allocation2] sm:$0xf]
    %v100 = vld [vmem:[#allocation7] sm:$0xff]
    %v101 = vld [vmem:[#allocation7 + $0x8] sm:$0x3]
    %v102 = vld [vmem:[#allocation8] sm:$0x3f]
    %v103 = vld [vmem:[#allocation5] sm:$0xff]
    %v104 = vld [vmem:[#allocation5 + $0x8] sm:$0xff]
    %v105 = vld [vmem:[#allocation5 + $0x10] sm:$0xff]
    %v106 = vld [vmem:[#allocation5 + $0x18] sm:$0xff]
    %v107 = vperm.slane %v100, 0
    %vm108 = vcmask 261120
    %v110 = vsel %vm108, %v95, 0
    %v113 = vsel %vm108, %v96, 0
    %115 = vmatpush.msra.mxu0 0.0
    %116 = vmatpush.msra.mxu0 0.0
    %117 = vmatpush.msra.mxu0 0.0
    %118 = vmatpush.msra.mxu0 0.0
    %119 = vmatpush.msra.mxu0 0.0
    %120 = vmatpush.msra.mxu0 0.0
    %121 = vmatpush.msra.mxu0 0.0
    %122 = vmatpush.msra.mxu0 0.0
    %123 = vmatpush.msra.mxu0 0.0
    %124 = vmatpush.msra.mxu0 0.0
    %125 = vmatpush.msra.mxu0 0.0
    %126 = vmatpush.msra.mxu0 0.0
    %127 = vmatpush.msra.mxu0 %v106
    %128 = vmatpush.msra.mxu0 %v105
    %129 = vmatpush.msra.mxu0 %v104
    %130 = vmatpush.msra.mxu0 %v103
    %131 = vmatmul.f32.gmra.mxu0 %v110
    %v132 = vpop.f32.mrf.mxu0
    %v133 = vadd.f32 %v107, %v132
    %134 = vmatmul.f32.gmra.mxu0 %v113
    %v135 = vpop.f32.mrf.mxu0
    %v136 = vadd.f32 %v107, %v135
    %137 = vdwg.mxu0
    %s138 = scalar_lea.vmem [#allocation5], 32
    %v139 = vld [vmem:[%s138] sm:$0xff]
    %v140 = vld [vmem:[%s138 + $0x8] sm:$0xff]
    %v141 = vld [vmem:[%s138 + $0x10] sm:$0xff]
    %v142 = vld [vmem:[%s138 + $0x18] sm:$0xff]
    %v143 = vperm.slane %v100, 1
    %144 = vmatpush.msra.mxu0 0.0
    %145 = vmatpush.msra.mxu0 0.0
    %146 = vmatpush.msra.mxu0 0.0
    %147 = vmatpush.msra.mxu0 0.0
    %148 = vmatpush.msra.mxu0 0.0
    %149 = vmatpush.msra.mxu0 0.0
    %150 = vmatpush.msra.mxu0 0.0
    %151 = vmatpush.msra.mxu0 0.0
    %152 = vmatpush.msra.mxu0 0.0
    %153 = vmatpush.msra.mxu0 0.0
    %154 = vmatpush.msra.mxu0 0.0
    %155 = vmatpush.msra.mxu0 0.0
    %156 = vmatpush.msra.mxu0 %v142
    %157 = vmatpush.msra.mxu0 %v141
    %158 = vmatpush.msra.mxu0 %v140
    %159 = vmatpush.msra.mxu0 %v139
    %160 = vmatmul.f32.gmra.mxu0 %v110
    %v161 = vpop.f32.mrf.mxu0
    %v162 = vadd.f32 %v143, %v161
    %163 = vmatmul.f32.gmra.mxu0 %v113
    %v164 = vpop.f32.mrf.mxu0
    %v165 = vadd.f32 %v143, %v164
    %166 = vdwg.mxu0
    %s167 = scalar_lea.vmem [#allocation5], 64
    %v168 = vld [vmem:[%s167] sm:$0xff]
    %v169 = vld [vmem:[%s167 + $0x8] sm:$0xff]
    %v170 = vld [vmem:[%s167 + $0x10] sm:$0xff]
    %v171 = vld [vmem:[%s167 + $0x18] sm:$0xff]
    %v172 = vperm.slane %v100, 2
    %173 = vmatpush.msra.mxu0 0.0
    %174 = vmatpush.msra.mxu0 0.0
    %175 = vmatpush.msra.mxu0 0.0
    %176 = vmatpush.msra.mxu0 0.0
    %177 = vmatpush.msra.mxu0 0.0
    %178 = vmatpush.msra.mxu0 0.0
    %179 = vmatpush.msra.mxu0 0.0
    %180 = vmatpush.msra.mxu0 0.0
    %181 = vmatpush.msra.mxu0 0.0
    %182 = vmatpush.msra.mxu0 0.0
    %183 = vmatpush.msra.mxu0 0.0
    %184 = vmatpush.msra.mxu0 0.0
    %185 = vmatpush.msra.mxu0 %v171
    %186 = vmatpush.msra.mxu0 %v170
    %187 = vmatpush.msra.mxu0 %v169
    %188 = vmatpush.msra.mxu0 %v168
    %189 = vmatmul.f32.gmra.mxu0 %v110
    %v190 = vpop.f32.mrf.mxu0
    %v191 = vadd.f32 %v172, %v190
    %192 = vmatmul.f32.gmra.mxu0 %v113
    %v193 = vpop.f32.mrf.mxu0
    %v194 = vadd.f32 %v172, %v193
    %195 = vdwg.mxu0
    %v196 = vld [vmem:[%s2] sm:$0xff]
    %v197 = vld [vmem:[%s2 + $0x8] sm:$0xff]
    %v199 = vrot.slane %v99, 1
    %v200 = vrot.slane %v99, 2
    %v201 = vrot.slane %v99, 3
    %v202 = vperm.slane %v99, 0
    %v203 = vperm.slane %v199, 0
    %v204 = vperm.slane %v200, 0
    %v205 = vperm.slane %v201, 0
    %v210 = vmul.f32 %v202, %v162
    %v211 = vmul.f32 %v202, %v165
    %v212 = vmul.f32 %v203, %v162
    %v213 = vmul.f32 %v203, %v165
    %v214 = vmul.f32 %v204, %v162
    %v215 = vmul.f32 %v204, %v165
    %v216 = vmul.f32 %v205, %v162
    %v217 = vmul.f32 %v205, %v165
    %v218 = vmul.f32 %v202, %v191
    %v219 = vmul.f32 %v202, %v194
    %v220 = vmul.f32 %v203, %v191
    %v221 = vmul.f32 %v203, %v194
    %v222 = vmul.f32 %v204, %v191
    %v223 = vmul.f32 %v204, %v194
    %v224 = vmul.f32 %v205, %v191
    %v225 = vmul.f32 %v205, %v194
    %v227 = vsel %vm108, %v133, 0
    %v230 = vsel %vm108, %v136, 0
    %v233 = vsel %vm108, %v210, 0
    %v236 = vsel %vm108, %v211, 0
    %v239 = vsel %vm108, %v212, 0
    %v242 = vsel %vm108, %v213, 0
    %v245 = vsel %vm108, %v214, 0
    %v248 = vsel %vm108, %v215, 0
    %v251 = vsel %vm108, %v216, 0
    %v254 = vsel %vm108, %v217, 0
    %256 = vmatpush.xpose.msra.mxu0 0.0
    %257 = vmatpush.xpose.msra.mxu0 0.0
    %258 = vmatpush.xpose.msra.mxu0 0.0
    %259 = vmatpush.xpose.msra.mxu0 0.0
    %260 = vmatpush.xpose.msra.mxu0 0.0
    %261 = vmatpush.xpose.msra.mxu0 0.0
    %262 = vmatpush.xpose.msra.mxu0 0.0
    %263 = vmatpush.xpose.msra.mxu0 0.0
    %264 = vmatpush.xpose.msra.mxu0 %v254
    %265 = vmatpush.xpose.msra.mxu0 %v251
    %266 = vmatpush.xpose.msra.mxu0 %v248
    %267 = vmatpush.xpose.msra.mxu0 %v245
    %268 = vmatpush.xpose.msra.mxu0 %v242
    %269 = vmatpush.xpose.msra.mxu0 %v239
    %270 = vmatpush.xpose.msra.mxu0 %v236
    %271 = vmatpush.xpose.msra.mxu0 %v233
    %272 = vmatmul.f32.gmra.mxu0 %v227
    %v273 = vpop.f32.mrf.mxu0
    %v274 = vadd.f32 %v196, %v273
    %275 = vmatmul.f32.gmra.mxu0 %v230
    %v276 = vpop.f32.mrf.mxu0
    %v277 = vadd.f32 %v197, %v276
    %278 = vdwg.mxu0
    %281 = vrot.lane.b32.xlu0 %v274, 112
    %v282 = vpop.permute.xlu0 %281
    %283 = vrot.lane.b32.xlu0 %v277, 112
    %v284 = vpop.permute.xlu0 %283
    %287 = vrot.lane.b32.xlu0 %v274, 96
    %v288 = vpop.permute.xlu0 %287
    %289 = vrot.lane.b32.xlu0 %v277, 96
    %v290 = vpop.permute.xlu0 %289
    %293 = vrot.lane.b32.xlu0 %v274, 80
    %v294 = vpop.permute.xlu0 %293
    %295 = vrot.lane.b32.xlu0 %v277, 80
    %v296 = vpop.permute.xlu0 %295
    %v299 = vrot.slane %v288, 4
    %vm300 = vcmask 1047556
    %v301 = vsel %vm300, %v299, %v274
    %v302 = vrot.slane %v274, 4
    %v303 = vsel %vm300, %v288, %v302
    %v305 = vunpack.c.l.s4 1983009808
    %v306 = vunpack.c.0.s8 %v305
    %v307 = vperm.slane %v301, %v306
    %v309 = vunpack.c.l.s4 1983009808
    %v310 = vunpack.c.0.s8 %v309
    %v311 = vperm.slane %v303, %v310
    %v312 = vrot.slane %v294, 4
    %v313 = vsel %vm300, %v312, %v282
    %v314 = vrot.slane %v282, 4
    %v315 = vsel %vm300, %v294, %v314
    %v317 = vunpack.c.l.s4 1983009808
    %v318 = vunpack.c.0.s8 %v317
    %v319 = vperm.slane %v313, %v318
    %v321 = vunpack.c.l.s4 1983009808
    %v322 = vunpack.c.0.s8 %v321
    %v323 = vperm.slane %v315, %v322
    %v324 = vrot.slane %v319, 4
    %v325 = vsel %vm300, %v324, %v307
    %v326 = vrot.slane %v307, 4
    %v327 = vsel %vm300, %v319, %v326
    %v329 = vunpack.c.l.s4 1934713408
    %v330 = vunpack.c.0.s8 %v329
    %v331 = vperm.slane %v325, %v330
    %v333 = vunpack.c.l.s4 1934713408
    %v334 = vunpack.c.0.s8 %v333
    %v335 = vperm.slane %v327, %v334
    %v336 = vrot.slane %v323, 4
    %v337 = vsel %vm300, %v336, %v311
    %v338 = vrot.slane %v311, 4
    %v339 = vsel %vm300, %v323, %v338
    %v341 = vunpack.c.l.s4 1934713408
    %v342 = vunpack.c.0.s8 %v341
    %v343 = vperm.slane %v337, %v342
    %v345 = vunpack.c.l.s4 1934713408
    %v346 = vunpack.c.0.s8 %v345
    %v347 = vperm.slane %v339, %v346
    %v348 = vrot.slane %v331, 4
    %v349 = vsel %vm300, 0.0, %v348
    %v350 = vrot.slane %v335, 4
    %v351 = vsel %vm300, 0.0, %v350
    %v352 = vrot.slane %v343, 4
    %v353 = vsel %vm300, 0.0, %v352
    %v354 = vrot.slane %v347, 4
    %v355 = vsel %vm300, 0.0, %v354
    %v356 = vrot.slane %v290, 4
    %v357 = vsel %vm300, %v356, %v277
    %v358 = vrot.slane %v277, 4
    %v359 = vsel %vm300, %v290, %v358
    %v361 = vunpack.c.l.s4 1983009808
    %v362 = vunpack.c.0.s8 %v361
    %v363 = vperm.slane %v357, %v362
    %v365 = vunpack.c.l.s4 1983009808
    %v366 = vunpack.c.0.s8 %v365
    %v367 = vperm.slane %v359, %v366
    %v368 = vrot.slane %v296, 4
    %v369 = vsel %vm300, %v368, %v284
    %v370 = vrot.slane %v284, 4
    %v371 = vsel %vm300, %v296, %v370
    %v373 = vunpack.c.l.s4 1983009808
    %v374 = vunpack.c.0.s8 %v373
    %v375 = vperm.slane %v369, %v374
    %v377 = vunpack.c.l.s4 1983009808
    %v378 = vunpack.c.0.s8 %v377
    %v379 = vperm.slane %v371, %v378
    %v380 = vrot.slane %v375, 4
    %v381 = vsel %vm300, %v380, %v363
    %v382 = vrot.slane %v363, 4
    %v383 = vsel %vm300, %v375, %v382
    %v385 = vunpack.c.l.s4 1934713408
    %v386 = vunpack.c.0.s8 %v385
    %v387 = vperm.slane %v381, %v386
    %v389 = vunpack.c.l.s4 1934713408
    %v390 = vunpack.c.0.s8 %v389
    %v391 = vperm.slane %v383, %v390
    %v392 = vrot.slane %v379, 4
    %v393 = vsel %vm300, %v392, %v367
    %v394 = vrot.slane %v367, 4
    %v395 = vsel %vm300, %v379, %v394
    %v397 = vunpack.c.l.s4 1934713408
    %v398 = vunpack.c.0.s8 %v397
    %v399 = vperm.slane %v393, %v398
    %v401 = vunpack.c.l.s4 1934713408
    %v402 = vunpack.c.0.s8 %v401
    %v403 = vperm.slane %v395, %v402
    %v404 = vrot.slane %v387, 4
    %v405 = vsel %vm300, 0.0, %v404
    %v406 = vrot.slane %v391, 4
    %v407 = vsel %vm300, 0.0, %v406
    %v408 = vrot.slane %v399, 4
    %v409 = vsel %vm300, 0.0, %v408
    %v410 = vrot.slane %v403, 4
    %v411 = vsel %vm300, 0.0, %v410
    %vm412 = vcmask 125952
    %v413 = vsel %vm412, %v331, -inf
    %414 = vmax.xlane.f32.xlu0 %v413
    %v415 = vpop.xlane.xlu0 %414
    %v416 = vsel %vm412, %v349, -inf
    %417 = vmax.xlane.f32.xlu0 %v416
    %v418 = vpop.xlane.xlu0 %417
    %v419 = vsel %vm412, %v335, -inf
    %420 = vmax.xlane.f32.xlu0 %v419
    %v421 = vpop.xlane.xlu0 %420
    %v422 = vsel %vm412, %v351, -inf
    %423 = vmax.xlane.f32.xlu0 %v422
    %v424 = vpop.xlane.xlu0 %423
    %v425 = vsel %vm412, %v343, -inf
    %426 = vmax.xlane.f32.xlu0 %v425
    %v427 = vpop.xlane.xlu0 %426
    %v428 = vsel %vm412, %v353, -inf
    %429 = vmax.xlane.f32.xlu0 %v428
    %v430 = vpop.xlane.xlu0 %429
    %v431 = vsel %vm412, %v347, -inf
    %432 = vmax.xlane.f32.xlu0 %v431
    %v433 = vpop.xlane.xlu0 %432
    %v434 = vsel %vm412, %v355, -inf
    %435 = vmax.xlane.f32.xlu0 %v434
    %v436 = vpop.xlane.xlu0 %435
    %v437 = vsel %vm412, %v387, -inf
    %438 = vmax.xlane.f32.xlu0 %v437
    %v439 = vpop.xlane.xlu0 %438
    %v440 = vsel %vm412, %v405, -inf
    %441 = vmax.xlane.f32.xlu0 %v440
    %v442 = vpop.xlane.xlu0 %441
    %v443 = vsel %vm412, %v391, -inf
    %444 = vmax.xlane.f32.xlu0 %v443
    %v445 = vpop.xlane.xlu0 %444
    %v446 = vsel %vm412, %v407, -inf
    %447 = vmax.xlane.f32.xlu0 %v446
    %v448 = vpop.xlane.xlu0 %447
    %v449 = vsel %vm412, %v399, -inf
    %450 = vmax.xlane.f32.xlu0 %v449
    %v451 = vpop.xlane.xlu0 %450
    %v452 = vsel %vm412, %v409, -inf
    %453 = vmax.xlane.f32.xlu0 %v452
    %v454 = vpop.xlane.xlu0 %453
    %v455 = vsel %vm412, %v403, -inf
    %456 = vmax.xlane.f32.xlu0 %v455
    %v457 = vpop.xlane.xlu0 %456
    %v458 = vsel %vm412, %v411, -inf
    %459 = vmax.xlane.f32.xlu0 %v458
    %v460 = vpop.xlane.xlu0 %459
    %v461 = vsub.f32 %v331, %v415
    %v462 = vsub.f32 %v349, %v418
    %v463 = vsub.f32 %v335, %v421
    %v464 = vsub.f32 %v351, %v424
    %v465 = vsub.f32 %v343, %v427
    %v466 = vsub.f32 %v353, %v430
    %v467 = vsub.f32 %v347, %v433
    %v468 = vsub.f32 %v355, %v436
    %v469 = vsub.f32 %v387, %v439
    %v470 = vsub.f32 %v405, %v442
    %v471 = vsub.f32 %v391, %v445
    %v472 = vsub.f32 %v407, %v448
    %v473 = vsub.f32 %v399, %v451
    %v474 = vsub.f32 %v409, %v454
    %v475 = vsub.f32 %v403, %v457
    %v476 = vsub.f32 %v411, %v460
    %v477 = vmul.f32 %v461, 1.442695
    %v478 = vpow.pop %v477
    %v479 = vmul.f32 %v462, 1.442695
    %v480 = vpow.pop %v479
    %v481 = vmul.f32 %v463, 1.442695
    %v482 = vpow.pop %v481
    %v483 = vmul.f32 %v464, 1.442695
    %v484 = vpow.pop %v483
    %v485 = vmul.f32 %v465, 1.442695
    %v486 = vpow.pop %v485
    %v487 = vmul.f32 %v466, 1.442695
    %v488 = vpow.pop %v487
    %v489 = vmul.f32 %v467, 1.442695
    %v490 = vpow.pop %v489
    %v491 = vmul.f32 %v468, 1.442695
    %v492 = vpow.pop %v491
    %v493 = vmul.f32 %v469, 1.442695
    %v494 = vpow.pop %v493
    %v495 = vmul.f32 %v470, 1.442695
    %v496 = vpow.pop %v495
    %v497 = vmul.f32 %v471, 1.442695
    %v498 = vpow.pop %v497
    %v499 = vmul.f32 %v472, 1.442695
    %v500 = vpow.pop %v499
    %v501 = vmul.f32 %v473, 1.442695
    %v502 = vpow.pop %v501
    %v503 = vmul.f32 %v474, 1.442695
    %v504 = vpow.pop %v503
    %v505 = vmul.f32 %v475, 1.442695
    %v506 = vpow.pop %v505
    %v507 = vmul.f32 %v476, 1.442695
    %v508 = vpow.pop %v507
    %v509 = vsel %vm412, %v478, 0.0
    %510 = vadd.xlane.f32.xlu0 %v509
    %v511 = vpop.xlane.xlu0 %510
    %v512 = vsel %vm412, %v480, 0.0
    %513 = vadd.xlane.f32.xlu0 %v512
    %v514 = vpop.xlane.xlu0 %513
    %v515 = vsel %vm412, %v482, 0.0
    %516 = vadd.xlane.f32.xlu0 %v515
    %v517 = vpop.xlane.xlu0 %516
    %v518 = vsel %vm412, %v484, 0.0
    %519 = vadd.xlane.f32.xlu0 %v518
    %v520 = vpop.xlane.xlu0 %519
    %v521 = vsel %vm412, %v486, 0.0
    %522 = vadd.xlane.f32.xlu0 %v521
    %v523 = vpop.xlane.xlu0 %522
    %v524 = vsel %vm412, %v488, 0.0
    %525 = vadd.xlane.f32.xlu0 %v524
    %v526 = vpop.xlane.xlu0 %525
    %v527 = vsel %vm412, %v490, 0.0
    %528 = vadd.xlane.f32.xlu0 %v527
    %v529 = vpop.xlane.xlu0 %528
    %v530 = vsel %vm412, %v492, 0.0
    %531 = vadd.xlane.f32.xlu0 %v530
    %v532 = vpop.xlane.xlu0 %531
    %v533 = vsel %vm412, %v494, 0.0
    %534 = vadd.xlane.f32.xlu0 %v533
    %v535 = vpop.xlane.xlu0 %534
    %v536 = vsel %vm412, %v496, 0.0
    %537 = vadd.xlane.f32.xlu0 %v536
    %v538 = vpop.xlane.xlu0 %537
    %v539 = vsel %vm412, %v498, 0.0
    %540 = vadd.xlane.f32.xlu0 %v539
    %v541 = vpop.xlane.xlu0 %540
    %v542 = vsel %vm412, %v500, 0.0
    %543 = vadd.xlane.f32.xlu0 %v542
    %v544 = vpop.xlane.xlu0 %543
    %v545 = vsel %vm412, %v502, 0.0
    %546 = vadd.xlane.f32.xlu0 %v545
    %v547 = vpop.xlane.xlu0 %546
    %v548 = vsel %vm412, %v504, 0.0
    %549 = vadd.xlane.f32.xlu0 %v548
    %v550 = vpop.xlane.xlu0 %549
    %v551 = vsel %vm412, %v506, 0.0
    %552 = vadd.xlane.f32.xlu0 %v551
    %v553 = vpop.xlane.xlu0 %552
    %v554 = vsel %vm412, %v508, 0.0
    %555 = vadd.xlane.f32.xlu0 %v554
    %v556 = vpop.xlane.xlu0 %555
    %v557 = vrcp.pop %v511
    %v558 = vmul.f32 %v511, %v557
    %v559 = vsub.f32 1.0, %v558
    %v560 = vmul.f32 %v557, %v559
    %v561 = vadd.f32 %v557, %v560
    %vm562 = vweird.f32 %v511
    %vm563 = vweird.f32 %v557
    %vm564 = vmor %vm562, %vm563
    %v565 = vsel %vm564, %v557, %v561
    %v566 = vand.u32 2147483647, %v511
    %vm567 = vcmp.eq.f32.partialorder %v566, 8.507059e+37
    %v568 = vand.u32 %v511, 2147483648
    %v569 = vor.u32 1.1754944e-38, %v568
    %v570 = vsel %vm567, %v569, %v565
    %v571 = vmul.f32 %v478, %v570
    %v572 = vrcp.pop %v514
    %v573 = vmul.f32 %v514, %v572
    %v574 = vsub.f32 1.0, %v573
    %v575 = vmul.f32 %v572, %v574
    %v576 = vadd.f32 %v572, %v575
    %vm577 = vweird.f32 %v514
    %vm578 = vweird.f32 %v572
    %vm579 = vmor %vm577, %vm578
    %v580 = vsel %vm579, %v572, %v576
    %v581 = vand.u32 2147483647, %v514
    %vm582 = vcmp.eq.f32.partialorder %v581, 8.507059e+37
    %v583 = vand.u32 %v514, 2147483648
    %v584 = vor.u32 1.1754944e-38, %v583
    %v585 = vsel %vm582, %v584, %v580
    %v586 = vmul.f32 %v480, %v585
    %v587 = vrcp.pop %v517
    %v588 = vmul.f32 %v517, %v587
    %v589 = vsub.f32 1.0, %v588
    %v590 = vmul.f32 %v587, %v589
    %v591 = vadd.f32 %v587, %v590
    %vm592 = vweird.f32 %v517
    %vm593 = vweird.f32 %v587
    %vm594 = vmor %vm592, %vm593
    %v595 = vsel %vm594, %v587, %v591
    %v596 = vand.u32 2147483647, %v517
    %vm597 = vcmp.eq.f32.partialorder %v596, 8.507059e+37
    %v598 = vand.u32 %v517, 2147483648
    %v599 = vor.u32 1.1754944e-38, %v598
    %v600 = vsel %vm597, %v599, %v595
    %v601 = vmul.f32 %v482, %v600
    %v602 = vrcp.pop %v520
    %v603 = vmul.f32 %v520, %v602
    %v604 = vsub.f32 1.0, %v603
    %v605 = vmul.f32 %v602, %v604
    %v606 = vadd.f32 %v602, %v605
    %vm607 = vweird.f32 %v520
    %vm608 = vweird.f32 %v602
    %vm609 = vmor %vm607, %vm608
    %v610 = vsel %vm609, %v602, %v606
    %v611 = vand.u32 2147483647, %v520
    %vm612 = vcmp.eq.f32.partialorder %v611, 8.507059e+37
    %v613 = vand.u32 %v520, 2147483648
    %v614 = vor.u32 1.1754944e-38, %v613
    %v615 = vsel %vm612, %v614, %v610
    %v616 = vmul.f32 %v484, %v615
    %v617 = vrcp.pop %v523
    %v618 = vmul.f32 %v523, %v617
    %v619 = vsub.f32 1.0, %v618
    %v620 = vmul.f32 %v617, %v619
    %v621 = vadd.f32 %v617, %v620
    %vm622 = vweird.f32 %v523
    %vm623 = vweird.f32 %v617
    %vm624 = vmor %vm622, %vm623
    %v625 = vsel %vm624, %v617, %v621
    %v626 = vand.u32 2147483647, %v523
    %vm627 = vcmp.eq.f32.partialorder %v626, 8.507059e+37
    %v628 = vand.u32 %v523, 2147483648
    %v629 = vor.u32 1.1754944e-38, %v628
    %v630 = vsel %vm627, %v629, %v625
    %v631 = vmul.f32 %v486, %v630
    %v632 = vrcp.pop %v526
    %v633 = vmul.f32 %v526, %v632
    %v634 = vsub.f32 1.0, %v633
    %v635 = vmul.f32 %v632, %v634
    %v636 = vadd.f32 %v632, %v635
    %vm637 = vweird.f32 %v526
    %vm638 = vweird.f32 %v632
    %vm639 = vmor %vm637, %vm638
    %v640 = vsel %vm639, %v632, %v636
    %v641 = vand.u32 2147483647, %v526
    %vm642 = vcmp.eq.f32.partialorder %v641, 8.507059e+37
    %v643 = vand.u32 %v526, 2147483648
    %v644 = vor.u32 1.1754944e-38, %v643
    %v645 = vsel %vm642, %v644, %v640
    %v646 = vmul.f32 %v488, %v645
    %v647 = vrcp.pop %v529
    %v648 = vmul.f32 %v529, %v647
    %v649 = vsub.f32 1.0, %v648
    %v650 = vmul.f32 %v647, %v649
    %v651 = vadd.f32 %v647, %v650
    %vm652 = vweird.f32 %v529
    %vm653 = vweird.f32 %v647
    %vm654 = vmor %vm652, %vm653
    %v655 = vsel %vm654, %v647, %v651
    %v656 = vand.u32 2147483647, %v529
    %vm657 = vcmp.eq.f32.partialorder %v656, 8.507059e+37
    %v658 = vand.u32 %v529, 2147483648
    %v659 = vor.u32 1.1754944e-38, %v658
    %v660 = vsel %vm657, %v659, %v655
    %v661 = vmul.f32 %v490, %v660
    %v662 = vrcp.pop %v532
    %v663 = vmul.f32 %v532, %v662
    %v664 = vsub.f32 1.0, %v663
    %v665 = vmul.f32 %v662, %v664
    %v666 = vadd.f32 %v662, %v665
    %vm667 = vweird.f32 %v532
    %vm668 = vweird.f32 %v662
    %vm669 = vmor %vm667, %vm668
    %v670 = vsel %vm669, %v662, %v666
    %v671 = vand.u32 2147483647, %v532
    %vm672 = vcmp.eq.f32.partialorder %v671, 8.507059e+37
    %v673 = vand.u32 %v532, 2147483648
    %v674 = vor.u32 1.1754944e-38, %v673
    %v675 = vsel %vm672, %v674, %v670
    %v676 = vmul.f32 %v492, %v675
    %v677 = vrcp.pop %v535
    %v678 = vmul.f32 %v535, %v677
    %v679 = vsub.f32 1.0, %v678
    %v680 = vmul.f32 %v677, %v679
    %v681 = vadd.f32 %v677, %v680
    %vm682 = vweird.f32 %v535
    %vm683 = vweird.f32 %v677
    %vm684 = vmor %vm682, %vm683
    %v685 = vsel %vm684, %v677, %v681
    %v686 = vand.u32 2147483647, %v535
    %vm687 = vcmp.eq.f32.partialorder %v686, 8.507059e+37
    %v688 = vand.u32 %v535, 2147483648
    %v689 = vor.u32 1.1754944e-38, %v688
    %v690 = vsel %vm687, %v689, %v685
    %v691 = vmul.f32 %v494, %v690
    %v692 = vrcp.pop %v538
    %v693 = vmul.f32 %v538, %v692
    %v694 = vsub.f32 1.0, %v693
    %v695 = vmul.f32 %v692, %v694
    %v696 = vadd.f32 %v692, %v695
    %vm697 = vweird.f32 %v538
    %vm698 = vweird.f32 %v692
    %vm699 = vmor %vm697, %vm698
    %v700 = vsel %vm699, %v692, %v696
    %v701 = vand.u32 2147483647, %v538
    %vm702 = vcmp.eq.f32.partialorder %v701, 8.507059e+37
    %v703 = vand.u32 %v538, 2147483648
    %v704 = vor.u32 1.1754944e-38, %v703
    %v705 = vsel %vm702, %v704, %v700
    %v706 = vmul.f32 %v496, %v705
    %v707 = vrcp.pop %v541
    %v708 = vmul.f32 %v541, %v707
    %v709 = vsub.f32 1.0, %v708
    %v710 = vmul.f32 %v707, %v709
    %v711 = vadd.f32 %v707, %v710
    %vm712 = vweird.f32 %v541
    %vm713 = vweird.f32 %v707
    %vm714 = vmor %vm712, %vm713
    %v715 = vsel %vm714, %v707, %v711
    %v716 = vand.u32 2147483647, %v541
    %vm717 = vcmp.eq.f32.partialorder %v716, 8.507059e+37
    %v718 = vand.u32 %v541, 2147483648
    %v719 = vor.u32 1.1754944e-38, %v718
    %v720 = vsel %vm717, %v719, %v715
    %v721 = vmul.f32 %v498, %v720
    %v722 = vrcp.pop %v544
    %v723 = vmul.f32 %v544, %v722
    %v724 = vsub.f32 1.0, %v723
    %v725 = vmul.f32 %v722, %v724
    %v726 = vadd.f32 %v722, %v725
    %vm727 = vweird.f32 %v544
    %vm728 = vweird.f32 %v722
    %vm729 = vmor %vm727, %vm728
    %v730 = vsel %vm729, %v722, %v726
    %v731 = vand.u32 2147483647, %v544
    %vm732 = vcmp.eq.f32.partialorder %v731, 8.507059e+37
    %v733 = vand.u32 %v544, 2147483648
    %v734 = vor.u32 1.1754944e-38, %v733
    %v735 = vsel %vm732, %v734, %v730
    %v736 = vmul.f32 %v500, %v735
    %v737 = vrcp.pop %v547
    %v738 = vmul.f32 %v547, %v737
    %v739 = vsub.f32 1.0, %v738
    %v740 = vmul.f32 %v737, %v739
    %v741 = vadd.f32 %v737, %v740
    %vm742 = vweird.f32 %v547
    %vm743 = vweird.f32 %v737
    %vm744 = vmor %vm742, %vm743
    %v745 = vsel %vm744, %v737, %v741
    %v746 = vand.u32 2147483647, %v547
    %vm747 = vcmp.eq.f32.partialorder %v746, 8.507059e+37
    %v748 = vand.u32 %v547, 2147483648
    %v749 = vor.u32 1.1754944e-38, %v748
    %v750 = vsel %vm747, %v749, %v745
    %v751 = vmul.f32 %v502, %v750
    %v752 = vrcp.pop %v550
    %v753 = vmul.f32 %v550, %v752
    %v754 = vsub.f32 1.0, %v753
    %v755 = vmul.f32 %v752, %v754
    %v756 = vadd.f32 %v752, %v755
    %vm757 = vweird.f32 %v550
    %vm758 = vweird.f32 %v752
    %vm759 = vmor %vm757, %vm758
    %v760 = vsel %vm759, %v752, %v756
    %v761 = vand.u32 2147483647, %v550
    %vm762 = vcmp.eq.f32.partialorder %v761, 8.507059e+37
    %v763 = vand.u32 %v550, 2147483648
    %v764 = vor.u32 1.1754944e-38, %v763
    %v765 = vsel %vm762, %v764, %v760
    %v766 = vmul.f32 %v504, %v765
    %v767 = vrcp.pop %v553
    %v768 = vmul.f32 %v553, %v767
    %v769 = vsub.f32 1.0, %v768
    %v770 = vmul.f32 %v767, %v769
    %v771 = vadd.f32 %v767, %v770
    %vm772 = vweird.f32 %v553
    %vm773 = vweird.f32 %v767
    %vm774 = vmor %vm772, %vm773
    %v775 = vsel %vm774, %v767, %v771
    %v776 = vand.u32 2147483647, %v553
    %vm777 = vcmp.eq.f32.partialorder %v776, 8.507059e+37
    %v778 = vand.u32 %v553, 2147483648
    %v779 = vor.u32 1.1754944e-38, %v778
    %v780 = vsel %vm777, %v779, %v775
    %v781 = vmul.f32 %v506, %v780
    %v782 = vrcp.pop %v556
    %v783 = vmul.f32 %v556, %v782
    %v784 = vsub.f32 1.0, %v783
    %v785 = vmul.f32 %v782, %v784
    %v786 = vadd.f32 %v782, %v785
    %vm787 = vweird.f32 %v556
    %vm788 = vweird.f32 %v782
    %vm789 = vmor %vm787, %vm788
    %v790 = vsel %vm789, %v782, %v786
    %v791 = vand.u32 2147483647, %v556
    %vm792 = vcmp.eq.f32.partialorder %v791, 8.507059e+37
    %v793 = vand.u32 %v556, 2147483648
    %v794 = vor.u32 1.1754944e-38, %v793
    %v795 = vsel %vm792, %v794, %v790
    %v796 = vmul.f32 %v508, %v795
    %v797 = vrot.slane %v601, 4
    %v798 = vsel %vm300, %v797, %v571
    %v800 = vunpack.c.l.s4 1983009808
    %v801 = vunpack.c.0.s8 %v800
    %v802 = vperm.slane %v798, %v801
    %v803 = vrot.slane %v616, 4
    %v804 = vsel %vm300, %v803, %v586
    %v806 = vunpack.c.l.s4 1983009808
    %v807 = vunpack.c.0.s8 %v806
    %v808 = vperm.slane %v804, %v807
    %v809 = vrot.slane %v661, 4
    %v810 = vsel %vm300, %v809, %v631
    %v812 = vunpack.c.l.s4 1983009808
    %v813 = vunpack.c.0.s8 %v812
    %v814 = vperm.slane %v810, %v813
    %v815 = vrot.slane %v676, 4
    %v816 = vsel %vm300, %v815, %v646
    %v818 = vunpack.c.l.s4 1983009808
    %v819 = vunpack.c.0.s8 %v818
    %v820 = vperm.slane %v816, %v819
    %v821 = vrot.slane %v808, 4
    %v822 = vsel %vm300, %v821, %v802
    %v823 = vrot.slane %v802, 4
    %v824 = vsel %vm300, %v808, %v823
    %v826 = vunpack.c.l.s4 1934713408
    %v827 = vunpack.c.0.s8 %v826
    %v828 = vperm.slane %v822, %v827
    %v830 = vunpack.c.l.s4 1934713408
    %v831 = vunpack.c.0.s8 %v830
    %v832 = vperm.slane %v824, %v831
    %v833 = vrot.slane %v820, 4
    %v834 = vsel %vm300, %v833, %v814
    %v835 = vrot.slane %v814, 4
    %v836 = vsel %vm300, %v820, %v835
    %v838 = vunpack.c.l.s4 1934713408
    %v839 = vunpack.c.0.s8 %v838
    %v840 = vperm.slane %v834, %v839
    %v842 = vunpack.c.l.s4 1934713408
    %v843 = vunpack.c.0.s8 %v842
    %v844 = vperm.slane %v836, %v843
    %v845 = vrot.slane %v840, 4
    %v846 = vsel %vm300, %v845, %v828
    %v847 = vrot.slane %v828, 4
    %v848 = vsel %vm300, %v840, %v847
    %v849 = vrot.slane %v844, 4
    %v850 = vsel %vm300, %v849, %v832
    %v851 = vrot.slane %v832, 4
    %v852 = vsel %vm300, %v844, %v851
    %v853 = vrot.slane %v721, 4
    %v854 = vsel %vm300, %v853, %v691
    %v856 = vunpack.c.l.s4 1983009808
    %v857 = vunpack.c.0.s8 %v856
    %v858 = vperm.slane %v854, %v857
    %v859 = vrot.slane %v736, 4
    %v860 = vsel %vm300, %v859, %v706
    %v862 = vunpack.c.l.s4 1983009808
    %v863 = vunpack.c.0.s8 %v862
    %v864 = vperm.slane %v860, %v863
    %v865 = vrot.slane %v781, 4
    %v866 = vsel %vm300, %v865, %v751
    %v868 = vunpack.c.l.s4 1983009808
    %v869 = vunpack.c.0.s8 %v868
    %v870 = vperm.slane %v866, %v869
    %v871 = vrot.slane %v796, 4
    %v872 = vsel %vm300, %v871, %v766
    %v874 = vunpack.c.l.s4 1983009808
    %v875 = vunpack.c.0.s8 %v874
    %v876 = vperm.slane %v872, %v875
    %v877 = vrot.slane %v864, 4
    %v878 = vsel %vm300, %v877, %v858
    %v879 = vrot.slane %v858, 4
    %v880 = vsel %vm300, %v864, %v879
    %v882 = vunpack.c.l.s4 1934713408
    %v883 = vunpack.c.0.s8 %v882
    %v884 = vperm.slane %v878, %v883
    %v886 = vunpack.c.l.s4 1934713408
    %v887 = vunpack.c.0.s8 %v886
    %v888 = vperm.slane %v880, %v887
    %v889 = vrot.slane %v876, 4
    %v890 = vsel %vm300, %v889, %v870
    %v891 = vrot.slane %v870, 4
    %v892 = vsel %vm300, %v876, %v891
    %v894 = vunpack.c.l.s4 1934713408
    %v895 = vunpack.c.0.s8 %v894
    %v896 = vperm.slane %v890, %v895
    %v898 = vunpack.c.l.s4 1934713408
    %v899 = vunpack.c.0.s8 %v898
    %v900 = vperm.slane %v892, %v899
    %v901 = vrot.slane %v896, 4
    %v902 = vsel %vm300, %v901, %v884
    %v903 = vrot.slane %v884, 4
    %v904 = vsel %vm300, %v896, %v903
    %v905 = vrot.slane %v900, 4
    %v906 = vsel %vm300, %v905, %v888
    %v907 = vrot.slane %v888, 4
    %v908 = vsel %vm300, %v900, %v907
    %911 = vrot.lane.b32.xlu0 %v848, 16
    %v912 = vpop.permute.xlu0 %911
    %913 = vrot.lane.b32.xlu0 %v904, 16
    %v914 = vpop.permute.xlu0 %913
    %919 = vrot.lane.b32.xlu0 %v850, 32
    %v920 = vpop.permute.xlu0 %919
    %921 = vrot.lane.b32.xlu0 %v906, 32
    %v922 = vpop.permute.xlu0 %921
    %927 = vrot.lane.b32.xlu0 %v852, 48
    %v928 = vpop.permute.xlu0 %927
    %929 = vrot.lane.b32.xlu0 %v908, 48
    %v930 = vpop.permute.xlu0 %929
    %vm933 = vcmask 130048
    %v934 = vsel %vm933, %v846, %v912
    %v935 = vsel %vm933, %v902, %v914
    %v936 = vsel %vm108, %v934, %v920
    %v937 = vsel %vm108, %v935, %v922
    %vm938 = vcmask 392192
    %v939 = vsel %vm938, %v936, %v928
    %v940 = vsel %vm938, %v937, %v930
    %vm941 = vcmask 523264
    %v943 = vsel %vm941, %v939, 0
    %v946 = vsel %vm941, %v940, 0
    %948 = vmatpush.msra.mxu0 0.0
    %949 = vmatpush.msra.mxu0 0.0
    %950 = vmatpush.msra.mxu0 0.0
    %951 = vmatpush.msra.mxu0 0.0
    %952 = vmatpush.msra.mxu0 0.0
    %953 = vmatpush.msra.mxu0 0.0
    %954 = vmatpush.msra.mxu0 0.0
    %955 = vmatpush.msra.mxu0 0.0
    %956 = vmatpush.msra.mxu0 %v225
    %957 = vmatpush.msra.mxu0 %v224
    %958 = vmatpush.msra.mxu0 %v223
    %959 = vmatpush.msra.mxu0 %v222
    %960 = vmatpush.msra.mxu0 %v221
    %961 = vmatpush.msra.mxu0 %v220
    %962 = vmatpush.msra.mxu0 %v219
    %963 = vmatpush.msra.mxu0 %v218
    %964 = vmatmul.f32.gmra.mxu0 %v943
    %v965 = vpop.f32.mrf.mxu0
    %v966 = vadd.f32 0.0, %v965
    %967 = vmatmul.f32.gmra.mxu0 %v946
    %v968 = vpop.f32.mrf.mxu0
    %v969 = vadd.f32 0.0, %v968
    %970 = vdwg.mxu0
    %s971 = scalar_lea.vmem [#allocation5], 96
    %v972 = vld [vmem:[%s971] sm:$0xff]
    %v973 = vld [vmem:[%s971 + $0x8] sm:$0xff]
    %v974 = vld [vmem:[%s971 + $0x10] sm:$0xff]
    %v975 = vld [vmem:[%s971 + $0x18] sm:$0xff]
    %v976 = vperm.slane %v100, 3
    %v978 = vsel %vm108, %v966, 0
    %v981 = vsel %vm108, %v969, 0
    %983 = vmatpush.msra.mxu0 0.0
    %984 = vmatpush.msra.mxu0 0.0
    %985 = vmatpush.msra.mxu0 0.0
    %986 = vmatpush.msra.mxu0 0.0
    %987 = vmatpush.msra.mxu0 0.0
    %988 = vmatpush.msra.mxu0 0.0
    %989 = vmatpush.msra.mxu0 0.0
    %990 = vmatpush.msra.mxu0 0.0
    %991 = vmatpush.msra.mxu0 0.0
    %992 = vmatpush.msra.mxu0 0.0
    %993 = vmatpush.msra.mxu0 0.0
    %994 = vmatpush.msra.mxu0 0.0
    %995 = vmatpush.msra.mxu0 %v975
    %996 = vmatpush.msra.mxu0 %v974
    %997 = vmatpush.msra.mxu0 %v973
    %998 = vmatpush.msra.mxu0 %v972
    %999 = vmatmul.f32.gmra.mxu0 %v978
    %v1000 = vpop.f32.mrf.mxu0
    %v1001 = vadd.f32 %v976, %v1000
    %1002 = vmatmul.f32.gmra.mxu0 %v981
    %v1003 = vpop.f32.mrf.mxu0
    %v1004 = vadd.f32 %v976, %v1003
    %1005 = vdwg.mxu0
    %v1006 = vadd.f32 %v95, %v1001
    %v1007 = vadd.f32 %v96, %v1004
    %v1008 = vsel %vm108, %v1006, 0.0
    %1009 = vadd.xlane.f32.xlu0 %v1008
    %v1010 = vpop.xlane.xlu0 %1009
    %v1011 = vsel %vm108, %v1007, 0.0
    %1012 = vadd.xlane.f32.xlu0 %v1011
    %v1013 = vpop.xlane.xlu0 %1012
    %v1014 = vrcp.pop 32.0
    %v1015 = vmul.f32 32.0, %v1014
    %v1016 = vsub.f32 1.0, %v1015
    %v1017 = vmul.f32 %v1014, %v1016
    %v1018 = vadd.f32 %v1014, %v1017
    %vm1019 = vweird.f32 %v1014
    %v1020 = vsel %vm1019, %v1014, %v1018
    %v1021 = vmul.f32 %v1010, %v1020
    %v1022 = vmul.f32 %v1013, %v1020
    %v1023 = vsub.f32 %v1006, %v1021
    %v1024 = vsub.f32 %v1007, %v1022
    %v1025 = vmul.f32 %v1023, %v1023
    %v1026 = vmul.f32 %v1024, %v1024
    %v1027 = vsel %vm108, %v1025, 0.0
    %1028 = vadd.xlane.f32.xlu0 %v1027
    %v1029 = vpop.xlane.xlu0 %1028
    %v1030 = vsel %vm108, %v1026, 0.0
    %1031 = vadd.xlane.f32.xlu0 %v1030
    %v1032 = vpop.xlane.xlu0 %1031
    %v1033 = vmul.f32 %v1029, %v1020
    %v1034 = vmul.f32 %v1032, %v1020
    %v1035 = vadd.f32 %v1033, 1e-05
    %v1036 = vadd.f32 %v1034, 1e-05
    %v1037 = vrsqrt.pop %v1035
    %v1038 = vmul.f32 %v1037, %v1035
    %v1039 = vmul.f32 %v1038, %v1037
    %v1040 = vmul.f32 0.5, %v1039
    %v1041 = vsub.f32 1.5, %v1040
    %v1042 = vmul.f32 %v1037, %v1041
    %vm1043 = vweird.f32 %v1035
    %vm1044 = vweird.f32 %v1037
    %vm1045 = vmor %vm1043, %vm1044
    %v1046 = vsel %vm1045, %v1037, %v1042
    %v1047 = vrsqrt.pop %v1036
    %v1048 = vmul.f32 %v1047, %v1036
    %v1049 = vmul.f32 %v1048, %v1047
    %v1050 = vmul.f32 0.5, %v1049
    %v1051 = vsub.f32 1.5, %v1050
    %v1052 = vmul.f32 %v1047, %v1051
    %vm1053 = vweird.f32 %v1036
    %vm1054 = vweird.f32 %v1047
    %vm1055 = vmor %vm1053, %vm1054
    %v1056 = vsel %vm1055, %v1047, %v1052
    %v1057 = vmul.f32 %v1023, %v1046
    %v1058 = vmul.f32 %v1024, %v1056
    %v1059 = vperm.slane %v102, 0
    %v1060 = vmul.f32 %v1057, %v1059
    %v1061 = vmul.f32 %v1058, %v1059
    %v1062 = vperm.slane %v102, 1
    %v1063 = vadd.f32 %v1060, %v1062
    %v1064 = vadd.f32 %v1061, %v1062
    %s1065 = scalar_lea.vmem [#allocation5], 128
    %v1066 = vld [vmem:[%s1065] sm:$0xff]
    %v1067 = vld [vmem:[%s1065 + $0x8] sm:$0xff]
    %v1068 = vld [vmem:[%s1065 + $0x10] sm:$0xff]
    %v1069 = vld [vmem:[%s1065 + $0x18] sm:$0xff]
    %v1070 = vperm.slane %v100, 4
    %v1072 = vsel %vm108, %v1063, 0
    %v1075 = vsel %vm108, %v1064, 0
    %1077 = vmatpush.msra.mxu0 0.0
    %1078 = vmatpush.msra.mxu0 0.0
    %1079 = vmatpush.msra.mxu0 0.0
    %1080 = vmatpush.msra.mxu0 0.0
    %1081 = vmatpush.msra.mxu0 0.0
    %1082 = vmatpush.msra.mxu0 0.0
    %1083 = vmatpush.msra.mxu0 0.0
    %1084 = vmatpush.msra.mxu0 0.0
    %1085 = vmatpush.msra.mxu0 0.0
    %1086 = vmatpush.msra.mxu0 0.0
    %1087 = vmatpush.msra.mxu0 0.0
    %1088 = vmatpush.msra.mxu0 0.0
    %1089 = vmatpush.msra.mxu0 %v1069
    %1090 = vmatpush.msra.mxu0 %v1068
    %1091 = vmatpush.msra.mxu0 %v1067
    %1092 = vmatpush.msra.mxu0 %v1066
    %1093 = vmatmul.f32.gmra.mxu0 %v1072
    %v1094 = vpop.f32.mrf.mxu0
    %v1095 = vadd.f32 %v1070, %v1094
    %1096 = vmatmul.f32.gmra.mxu0 %v1075
    %v1097 = vpop.f32.mrf.mxu0
    %v1098 = vadd.f32 %v1070, %v1097
    %1099 = vdwg.mxu0
    %s1100 = scalar_lea.vmem [#allocation5], 160
    %v1101 = vld [vmem:[%s1100] sm:$0xff]
    %v1102 = vld [vmem:[%s1100 + $0x8] sm:$0xff]
    %v1103 = vld [vmem:[%s1100 + $0x10] sm:$0xff]
    %v1104 = vld [vmem:[%s1100 + $0x18] sm:$0xff]
    %v1105 = vperm.slane %v100, 5
    %v1107 = vsel %vm108, %v97, 0
    %v1110 = vsel %vm108, %v98, 0
    %1112 = vmatpush.msra.mxu0 0.0
    %1113 = vmatpush.msra.mxu0 0.0
    %1114 = vmatpush.msra.mxu0 0.0
    %1115 = vmatpush.msra.mxu0 0.0
    %1116 = vmatpush.msra.mxu0 0.0
    %1117 = vmatpush.msra.mxu0 0.0
    %1118 = vmatpush.msra.mxu0 0.0
    %1119 = vmatpush.msra.mxu0 0.0
    %1120 = vmatpush.msra.mxu0 0.0
    %1121 = vmatpush.msra.mxu0 0.0
    %1122 = vmatpush.msra.mxu0 0.0
    %1123 = vmatpush.msra.mxu0 0.0
    %1124 = vmatpush.msra.mxu0 %v1104
    %1125 = vmatpush.msra.mxu0 %v1103
    %1126 = vmatpush.msra.mxu0 %v1102
    %1127 = vmatpush.msra.mxu0 %v1101
    %1128 = vmatmul.f32.gmra.mxu0 %v1107
    %v1129 = vpop.f32.mrf.mxu0
    %v1130 = vadd.f32 %v1105, %v1129
    %1131 = vmatmul.f32.gmra.mxu0 %v1110
    %v1132 = vpop.f32.mrf.mxu0
    %v1133 = vadd.f32 %v1105, %v1132
    %1134 = vdwg.mxu0
    %s1135 = scalar_lea.vmem [#allocation5], 192
    %v1136 = vld [vmem:[%s1135] sm:$0xff]
    %v1137 = vld [vmem:[%s1135 + $0x8] sm:$0xff]
    %v1138 = vld [vmem:[%s1135 + $0x10] sm:$0xff]
    %v1139 = vld [vmem:[%s1135 + $0x18] sm:$0xff]
    %v1140 = vperm.slane %v100, 6
    %1141 = vmatpush.msra.mxu0 0.0
    %1142 = vmatpush.msra.mxu0 0.0
    %1143 = vmatpush.msra.mxu0 0.0
    %1144 = vmatpush.msra.mxu0 0.0
    %1145 = vmatpush.msra.mxu0 0.0
    %1146 = vmatpush.msra.mxu0 0.0
    %1147 = vmatpush.msra.mxu0 0.0
    %1148 = vmatpush.msra.mxu0 0.0
    %1149 = vmatpush.msra.mxu0 0.0
    %1150 = vmatpush.msra.mxu0 0.0
    %1151 = vmatpush.msra.mxu0 0.0
    %1152 = vmatpush.msra.mxu0 0.0
    %1153 = vmatpush.msra.mxu0 %v1139
    %1154 = vmatpush.msra.mxu0 %v1138
    %1155 = vmatpush.msra.mxu0 %v1137
    %1156 = vmatpush.msra.mxu0 %v1136
    %1157 = vmatmul.f32.gmra.mxu0 %v1107
    %v1158 = vpop.f32.mrf.mxu0
    %v1159 = vadd.f32 %v1140, %v1158
    %1160 = vmatmul.f32.gmra.mxu0 %v1110
    %v1161 = vpop.f32.mrf.mxu0
    %v1162 = vadd.f32 %v1140, %v1161
    %1163 = vdwg.mxu0
    %v1164 = vld [vmem:[%s3] sm:$0xff]
    %v1165 = vld [vmem:[%s3 + $0x8] sm:$0xff]
    %v1166 = vmul.f32 %v202, %v1130
    %v1167 = vmul.f32 %v202, %v1133
    %v1168 = vmul.f32 %v203, %v1130
    %v1169 = vmul.f32 %v203, %v1133
    %v1170 = vmul.f32 %v204, %v1130
    %v1171 = vmul.f32 %v204, %v1133
    %v1172 = vmul.f32 %v205, %v1130
    %v1173 = vmul.f32 %v205, %v1133
    %v1174 = vmul.f32 %v202, %v1159
    %v1175 = vmul.f32 %v202, %v1162
    %v1176 = vmul.f32 %v203, %v1159
    %v1177 = vmul.f32 %v203, %v1162
    %v1178 = vmul.f32 %v204, %v1159
    %v1179 = vmul.f32 %v204, %v1162
    %v1180 = vmul.f32 %v205, %v1159
    %v1181 = vmul.f32 %v205, %v1162
    %v1183 = vsel %vm108, %v1095, 0
    %v1186 = vsel %vm108, %v1098, 0
    %v1189 = vsel %vm108, %v1166, 0
    %v1192 = vsel %vm108, %v1167, 0
    %v1195 = vsel %vm108, %v1168, 0
    %v1198 = vsel %vm108, %v1169, 0
    %v1201 = vsel %vm108, %v1170, 0
    %v1204 = vsel %vm108, %v1171, 0
    %v1207 = vsel %vm108, %v1172, 0
    %v1210 = vsel %vm108, %v1173, 0
    %1212 = vmatpush.xpose.msra.mxu0 0.0
    %1213 = vmatpush.xpose.msra.mxu0 0.0
    %1214 = vmatpush.xpose.msra.mxu0 0.0
    %1215 = vmatpush.xpose.msra.mxu0 0.0
    %1216 = vmatpush.xpose.msra.mxu0 0.0
    %1217 = vmatpush.xpose.msra.mxu0 0.0
    %1218 = vmatpush.xpose.msra.mxu0 0.0
    %1219 = vmatpush.xpose.msra.mxu0 0.0
    %1220 = vmatpush.xpose.msra.mxu0 %v1210
    %1221 = vmatpush.xpose.msra.mxu0 %v1207
    %1222 = vmatpush.xpose.msra.mxu0 %v1204
    %1223 = vmatpush.xpose.msra.mxu0 %v1201
    %1224 = vmatpush.xpose.msra.mxu0 %v1198
    %1225 = vmatpush.xpose.msra.mxu0 %v1195
    %1226 = vmatpush.xpose.msra.mxu0 %v1192
    %1227 = vmatpush.xpose.msra.mxu0 %v1189
    %1228 = vmatmul.f32.gmra.mxu0 %v1183
    %v1229 = vpop.f32.mrf.mxu0
    %v1230 = vadd.f32 %v1164, %v1229
    %1231 = vmatmul.f32.gmra.mxu0 %v1186
    %v1232 = vpop.f32.mrf.mxu0
    %v1233 = vadd.f32 %v1165, %v1232
    %1234 = vdwg.mxu0
    %1237 = vrot.lane.b32.xlu0 %v1230, 112
    %v1238 = vpop.permute.xlu0 %1237
    %1239 = vrot.lane.b32.xlu0 %v1233, 112
    %v1240 = vpop.permute.xlu0 %1239
    %1243 = vrot.lane.b32.xlu0 %v1230, 96
    %v1244 = vpop.permute.xlu0 %1243
    %1245 = vrot.lane.b32.xlu0 %v1233, 96
    %v1246 = vpop.permute.xlu0 %1245
    %1249 = vrot.lane.b32.xlu0 %v1230, 80
    %v1250 = vpop.permute.xlu0 %1249
    %1251 = vrot.lane.b32.xlu0 %v1233, 80
    %v1252 = vpop.permute.xlu0 %1251
    %v1255 = vrot.slane %v1244, 4
    %v1256 = vsel %vm300, %v1255, %v1230
    %v1257 = vrot.slane %v1230, 4
    %v1258 = vsel %vm300, %v1244, %v1257
    %v1260 = vunpack.c.l.s4 1983009808
    %v1261 = vunpack.c.0.s8 %v1260
    %v1262 = vperm.slane %v1256, %v1261
    %v1264 = vunpack.c.l.s4 1983009808
    %v1265 = vunpack.c.0.s8 %v1264
    %v1266 = vperm.slane %v1258, %v1265
    %v1267 = vrot.slane %v1250, 4
    %v1268 = vsel %vm300, %v1267, %v1238
    %v1269 = vrot.slane %v1238, 4
    %v1270 = vsel %vm300, %v1250, %v1269
    %v1272 = vunpack.c.l.s4 1983009808
    %v1273 = vunpack.c.0.s8 %v1272
    %v1274 = vperm.slane %v1268, %v1273
    %v1276 = vunpack.c.l.s4 1983009808
    %v1277 = vunpack.c.0.s8 %v1276
    %v1278 = vperm.slane %v1270, %v1277
    %v1279 = vrot.slane %v1274, 4
    %v1280 = vsel %vm300, %v1279, %v1262
    %v1281 = vrot.slane %v1262, 4
    %v1282 = vsel %vm300, %v1274, %v1281
    %v1284 = vunpack.c.l.s4 1934713408
    %v1285 = vunpack.c.0.s8 %v1284
    %v1286 = vperm.slane %v1280, %v1285
    %v1288 = vunpack.c.l.s4 1934713408
    %v1289 = vunpack.c.0.s8 %v1288
    %v1290 = vperm.slane %v1282, %v1289
    %v1291 = vrot.slane %v1278, 4
    %v1292 = vsel %vm300, %v1291, %v1266
    %v1293 = vrot.slane %v1266, 4
    %v1294 = vsel %vm300, %v1278, %v1293
    %v1296 = vunpack.c.l.s4 1934713408
    %v1297 = vunpack.c.0.s8 %v1296
    %v1298 = vperm.slane %v1292, %v1297
    %v1300 = vunpack.c.l.s4 1934713408
    %v1301 = vunpack.c.0.s8 %v1300
    %v1302 = vperm.slane %v1294, %v1301
    %v1303 = vrot.slane %v1286, 4
    %v1304 = vsel %vm300, 0.0, %v1303
    %v1305 = vrot.slane %v1290, 4
    %v1306 = vsel %vm300, 0.0, %v1305
    %v1307 = vrot.slane %v1298, 4
    %v1308 = vsel %vm300, 0.0, %v1307
    %v1309 = vrot.slane %v1302, 4
    %v1310 = vsel %vm300, 0.0, %v1309
    %v1311 = vrot.slane %v1246, 4
    %v1312 = vsel %vm300, %v1311, %v1233
    %v1313 = vrot.slane %v1233, 4
    %v1314 = vsel %vm300, %v1246, %v1313
    %v1316 = vunpack.c.l.s4 1983009808
    %v1317 = vunpack.c.0.s8 %v1316
    %v1318 = vperm.slane %v1312, %v1317
    %v1320 = vunpack.c.l.s4 1983009808
    %v1321 = vunpack.c.0.s8 %v1320
    %v1322 = vperm.slane %v1314, %v1321
    %v1323 = vrot.slane %v1252, 4
    %v1324 = vsel %vm300, %v1323, %v1240
    %v1325 = vrot.slane %v1240, 4
    %v1326 = vsel %vm300, %v1252, %v1325
    %v1328 = vunpack.c.l.s4 1983009808
    %v1329 = vunpack.c.0.s8 %v1328
    %v1330 = vperm.slane %v1324, %v1329
    %v1332 = vunpack.c.l.s4 1983009808
    %v1333 = vunpack.c.0.s8 %v1332
    %v1334 = vperm.slane %v1326, %v1333
    %v1335 = vrot.slane %v1330, 4
    %v1336 = vsel %vm300, %v1335, %v1318
    %v1337 = vrot.slane %v1318, 4
    %v1338 = vsel %vm300, %v1330, %v1337
    %v1340 = vunpack.c.l.s4 1934713408
    %v1341 = vunpack.c.0.s8 %v1340
    %v1342 = vperm.slane %v1336, %v1341
    %v1344 = vunpack.c.l.s4 1934713408
    %v1345 = vunpack.c.0.s8 %v1344
    %v1346 = vperm.slane %v1338, %v1345
    %v1347 = vrot.slane %v1334, 4
    %v1348 = vsel %vm300, %v1347, %v1322
    %v1349 = vrot.slane %v1322, 4
    %v1350 = vsel %vm300, %v1334, %v1349
    %v1352 = vunpack.c.l.s4 1934713408
    %v1353 = vunpack.c.0.s8 %v1352
    %v1354 = vperm.slane %v1348, %v1353
    %v1356 = vunpack.c.l.s4 1934713408
    %v1357 = vunpack.c.0.s8 %v1356
    %v1358 = vperm.slane %v1350, %v1357
    %v1359 = vrot.slane %v1342, 4
    %v1360 = vsel %vm300, 0.0, %v1359
    %v1361 = vrot.slane %v1346, 4
    %v1362 = vsel %vm300, 0.0, %v1361
    %v1363 = vrot.slane %v1354, 4
    %v1364 = vsel %vm300, 0.0, %v1363
    %v1365 = vrot.slane %v1358, 4
    %v1366 = vsel %vm300, 0.0, %v1365
    %v1367 = vsel %vm412, %v1286, -inf
    %1368 = vmax.xlane.f32.xlu0 %v1367
    %v1369 = vpop.xlane.xlu0 %1368
    %v1370 = vsel %vm412, %v1304, -inf
    %1371 = vmax.xlane.f32.xlu0 %v1370
    %v1372 = vpop.xlane.xlu0 %1371
    %v1373 = vsel %vm412, %v1290, -inf
    %1374 = vmax.xlane.f32.xlu0 %v1373
    %v1375 = vpop.xlane.xlu0 %1374
    %v1376 = vsel %vm412, %v1306, -inf
    %1377 = vmax.xlane.f32.xlu0 %v1376
    %v1378 = vpop.xlane.xlu0 %1377
    %v1379 = vsel %vm412, %v1298, -inf
    %1380 = vmax.xlane.f32.xlu0 %v1379
    %v1381 = vpop.xlane.xlu0 %1380
    %v1382 = vsel %vm412, %v1308, -inf
    %1383 = vmax.xlane.f32.xlu0 %v1382
    %v1384 = vpop.xlane.xlu0 %1383
    %v1385 = vsel %vm412, %v1302, -inf
    %1386 = vmax.xlane.f32.xlu0 %v1385
    %v1387 = vpop.xlane.xlu0 %1386
    %v1388 = vsel %vm412, %v1310, -inf
    %1389 = vmax.xlane.f32.xlu0 %v1388
    %v1390 = vpop.xlane.xlu0 %1389
    %v1391 = vsel %vm412, %v1342, -inf
    %1392 = vmax.xlane.f32.xlu0 %v1391
    %v1393 = vpop.xlane.xlu0 %1392
    %v1394 = vsel %vm412, %v1360, -inf
    %1395 = vmax.xlane.f32.xlu0 %v1394
    %v1396 = vpop.xlane.xlu0 %1395
    %v1397 = vsel %vm412, %v1346, -inf
    %1398 = vmax.xlane.f32.xlu0 %v1397
    %v1399 = vpop.xlane.xlu0 %1398
    %v1400 = vsel %vm412, %v1362, -inf
    %1401 = vmax.xlane.f32.xlu0 %v1400
    %v1402 = vpop.xlane.xlu0 %1401
    %v1403 = vsel %vm412, %v1354, -inf
    %1404 = vmax.xlane.f32.xlu0 %v1403
    %v1405 = vpop.xlane.xlu0 %1404
    %v1406 = vsel %vm412, %v1364, -inf
    %1407 = vmax.xlane.f32.xlu0 %v1406
    %v1408 = vpop.xlane.xlu0 %1407
    %v1409 = vsel %vm412, %v1358, -inf
    %1410 = vmax.xlane.f32.xlu0 %v1409
    %v1411 = vpop.xlane.xlu0 %1410
    %v1412 = vsel %vm412, %v1366, -inf
    %1413 = vmax.xlane.f32.xlu0 %v1412
    %v1414 = vpop.xlane.xlu0 %1413
    %v1415 = vsub.f32 %v1286, %v1369
    %v1416 = vsub.f32 %v1304, %v1372
    %v1417 = vsub.f32 %v1290, %v1375
    %v1418 = vsub.f32 %v1306, %v1378
    %v1419 = vsub.f32 %v1298, %v1381
    %v1420 = vsub.f32 %v1308, %v1384
    %v1421 = vsub.f32 %v1302, %v1387
    %v1422 = vsub.f32 %v1310, %v1390
    %v1423 = vsub.f32 %v1342, %v1393
    %v1424 = vsub.f32 %v1360, %v1396
    %v1425 = vsub.f32 %v1346, %v1399
    %v1426 = vsub.f32 %v1362, %v1402
    %v1427 = vsub.f32 %v1354, %v1405
    %v1428 = vsub.f32 %v1364, %v1408
    %v1429 = vsub.f32 %v1358, %v1411
    %v1430 = vsub.f32 %v1366, %v1414
    %v1431 = vmul.f32 %v1415, 1.442695
    %v1432 = vpow.pop %v1431
    %v1433 = vmul.f32 %v1416, 1.442695
    %v1434 = vpow.pop %v1433
    %v1435 = vmul.f32 %v1417, 1.442695
    %v1436 = vpow.pop %v1435
    %v1437 = vmul.f32 %v1418, 1.442695
    %v1438 = vpow.pop %v1437
    %v1439 = vmul.f32 %v1419, 1.442695
    %v1440 = vpow.pop %v1439
    %v1441 = vmul.f32 %v1420, 1.442695
    %v1442 = vpow.pop %v1441
    %v1443 = vmul.f32 %v1421, 1.442695
    %v1444 = vpow.pop %v1443
    %v1445 = vmul.f32 %v1422, 1.442695
    %v1446 = vpow.pop %v1445
    %v1447 = vmul.f32 %v1423, 1.442695
    %v1448 = vpow.pop %v1447
    %v1449 = vmul.f32 %v1424, 1.442695
    %v1450 = vpow.pop %v1449
    %v1451 = vmul.f32 %v1425, 1.442695
    %v1452 = vpow.pop %v1451
    %v1453 = vmul.f32 %v1426, 1.442695
    %v1454 = vpow.pop %v1453
    %v1455 = vmul.f32 %v1427, 1.442695
    %v1456 = vpow.pop %v1455
    %v1457 = vmul.f32 %v1428, 1.442695
    %v1458 = vpow.pop %v1457
    %v1459 = vmul.f32 %v1429, 1.442695
    %v1460 = vpow.pop %v1459
    %v1461 = vmul.f32 %v1430, 1.442695
    %v1462 = vpow.pop %v1461
    %v1463 = vsel %vm412, %v1432, 0.0
    %1464 = vadd.xlane.f32.xlu0 %v1463
    %v1465 = vpop.xlane.xlu0 %1464
    %v1466 = vsel %vm412, %v1434, 0.0
    %1467 = vadd.xlane.f32.xlu0 %v1466
    %v1468 = vpop.xlane.xlu0 %1467
    %v1469 = vsel %vm412, %v1436, 0.0
    %1470 = vadd.xlane.f32.xlu0 %v1469
    %v1471 = vpop.xlane.xlu0 %1470
    %v1472 = vsel %vm412, %v1438, 0.0
    %1473 = vadd.xlane.f32.xlu0 %v1472
    %v1474 = vpop.xlane.xlu0 %1473
    %v1475 = vsel %vm412, %v1440, 0.0
    %1476 = vadd.xlane.f32.xlu0 %v1475
    %v1477 = vpop.xlane.xlu0 %1476
    %v1478 = vsel %vm412, %v1442, 0.0
    %1479 = vadd.xlane.f32.xlu0 %v1478
    %v1480 = vpop.xlane.xlu0 %1479
    %v1481 = vsel %vm412, %v1444, 0.0
    %1482 = vadd.xlane.f32.xlu0 %v1481
    %v1483 = vpop.xlane.xlu0 %1482
    %v1484 = vsel %vm412, %v1446, 0.0
    %1485 = vadd.xlane.f32.xlu0 %v1484
    %v1486 = vpop.xlane.xlu0 %1485
    %v1487 = vsel %vm412, %v1448, 0.0
    %1488 = vadd.xlane.f32.xlu0 %v1487
    %v1489 = vpop.xlane.xlu0 %1488
    %v1490 = vsel %vm412, %v1450, 0.0
    %1491 = vadd.xlane.f32.xlu0 %v1490
    %v1492 = vpop.xlane.xlu0 %1491
    %v1493 = vsel %vm412, %v1452, 0.0
    %1494 = vadd.xlane.f32.xlu0 %v1493
    %v1495 = vpop.xlane.xlu0 %1494
    %v1496 = vsel %vm412, %v1454, 0.0
    %1497 = vadd.xlane.f32.xlu0 %v1496
    %v1498 = vpop.xlane.xlu0 %1497
    %v1499 = vsel %vm412, %v1456, 0.0
    %1500 = vadd.xlane.f32.xlu0 %v1499
    %v1501 = vpop.xlane.xlu0 %1500
    %v1502 = vsel %vm412, %v1458, 0.0
    %1503 = vadd.xlane.f32.xlu0 %v1502
    %v1504 = vpop.xlane.xlu0 %1503
    %v1505 = vsel %vm412, %v1460, 0.0
    %1506 = vadd.xlane.f32.xlu0 %v1505
    %v1507 = vpop.xlane.xlu0 %1506
    %v1508 = vsel %vm412, %v1462, 0.0
    %1509 = vadd.xlane.f32.xlu0 %v1508
    %v1510 = vpop.xlane.xlu0 %1509
    %v1511 = vrcp.pop %v1465
    %v1512 = vmul.f32 %v1465, %v1511
    %v1513 = vsub.f32 1.0, %v1512
    %v1514 = vmul.f32 %v1511, %v1513
    %v1515 = vadd.f32 %v1511, %v1514
    %vm1516 = vweird.f32 %v1465
    %vm1517 = vweird.f32 %v1511
    %vm1518 = vmor %vm1516, %vm1517
    %v1519 = vsel %vm1518, %v1511, %v1515
    %v1520 = vand.u32 2147483647, %v1465
    %vm1521 = vcmp.eq.f32.partialorder %v1520, 8.507059e+37
    %v1522 = vand.u32 %v1465, 2147483648
    %v1523 = vor.u32 1.1754944e-38, %v1522
    %v1524 = vsel %vm1521, %v1523, %v1519
    %v1525 = vmul.f32 %v1432, %v1524
    %v1526 = vrcp.pop %v1468
    %v1527 = vmul.f32 %v1468, %v1526
    %v1528 = vsub.f32 1.0, %v1527
    %v1529 = vmul.f32 %v1526, %v1528
    %v1530 = vadd.f32 %v1526, %v1529
    %vm1531 = vweird.f32 %v1468
    %vm1532 = vweird.f32 %v1526
    %vm1533 = vmor %vm1531, %vm1532
    %v1534 = vsel %vm1533, %v1526, %v1530
    %v1535 = vand.u32 2147483647, %v1468
    %vm1536 = vcmp.eq.f32.partialorder %v1535, 8.507059e+37
    %v1537 = vand.u32 %v1468, 2147483648
    %v1538 = vor.u32 1.1754944e-38, %v1537
    %v1539 = vsel %vm1536, %v1538, %v1534
    %v1540 = vmul.f32 %v1434, %v1539
    %v1541 = vrcp.pop %v1471
    %v1542 = vmul.f32 %v1471, %v1541
    %v1543 = vsub.f32 1.0, %v1542
    %v1544 = vmul.f32 %v1541, %v1543
    %v1545 = vadd.f32 %v1541, %v1544
    %vm1546 = vweird.f32 %v1471
    %vm1547 = vweird.f32 %v1541
    %vm1548 = vmor %vm1546, %vm1547
    %v1549 = vsel %vm1548, %v1541, %v1545
    %v1550 = vand.u32 2147483647, %v1471
    %vm1551 = vcmp.eq.f32.partialorder %v1550, 8.507059e+37
    %v1552 = vand.u32 %v1471, 2147483648
    %v1553 = vor.u32 1.1754944e-38, %v1552
    %v1554 = vsel %vm1551, %v1553, %v1549
    %v1555 = vmul.f32 %v1436, %v1554
    %v1556 = vrcp.pop %v1474
    %v1557 = vmul.f32 %v1474, %v1556
    %v1558 = vsub.f32 1.0, %v1557
    %v1559 = vmul.f32 %v1556, %v1558
    %v1560 = vadd.f32 %v1556, %v1559
    %vm1561 = vweird.f32 %v1474
    %vm1562 = vweird.f32 %v1556
    %vm1563 = vmor %vm1561, %vm1562
    %v1564 = vsel %vm1563, %v1556, %v1560
    %v1565 = vand.u32 2147483647, %v1474
    %vm1566 = vcmp.eq.f32.partialorder %v1565, 8.507059e+37
    %v1567 = vand.u32 %v1474, 2147483648
    %v1568 = vor.u32 1.1754944e-38, %v1567
    %v1569 = vsel %vm1566, %v1568, %v1564
    %v1570 = vmul.f32 %v1438, %v1569
    %v1571 = vrcp.pop %v1477
    %v1572 = vmul.f32 %v1477, %v1571
    %v1573 = vsub.f32 1.0, %v1572
    %v1574 = vmul.f32 %v1571, %v1573
    %v1575 = vadd.f32 %v1571, %v1574
    %vm1576 = vweird.f32 %v1477
    %vm1577 = vweird.f32 %v1571
    %vm1578 = vmor %vm1576, %vm1577
    %v1579 = vsel %vm1578, %v1571, %v1575
    %v1580 = vand.u32 2147483647, %v1477
    %vm1581 = vcmp.eq.f32.partialorder %v1580, 8.507059e+37
    %v1582 = vand.u32 %v1477, 2147483648
    %v1583 = vor.u32 1.1754944e-38, %v1582
    %v1584 = vsel %vm1581, %v1583, %v1579
    %v1585 = vmul.f32 %v1440, %v1584
    %v1586 = vrcp.pop %v1480
    %v1587 = vmul.f32 %v1480, %v1586
    %v1588 = vsub.f32 1.0, %v1587
    %v1589 = vmul.f32 %v1586, %v1588
    %v1590 = vadd.f32 %v1586, %v1589
    %vm1591 = vweird.f32 %v1480
    %vm1592 = vweird.f32 %v1586
    %vm1593 = vmor %vm1591, %vm1592
    %v1594 = vsel %vm1593, %v1586, %v1590
    %v1595 = vand.u32 2147483647, %v1480
    %vm1596 = vcmp.eq.f32.partialorder %v1595, 8.507059e+37
    %v1597 = vand.u32 %v1480, 2147483648
    %v1598 = vor.u32 1.1754944e-38, %v1597
    %v1599 = vsel %vm1596, %v1598, %v1594
    %v1600 = vmul.f32 %v1442, %v1599
    %v1601 = vrcp.pop %v1483
    %v1602 = vmul.f32 %v1483, %v1601
    %v1603 = vsub.f32 1.0, %v1602
    %v1604 = vmul.f32 %v1601, %v1603
    %v1605 = vadd.f32 %v1601, %v1604
    %vm1606 = vweird.f32 %v1483
    %vm1607 = vweird.f32 %v1601
    %vm1608 = vmor %vm1606, %vm1607
    %v1609 = vsel %vm1608, %v1601, %v1605
    %v1610 = vand.u32 2147483647, %v1483
    %vm1611 = vcmp.eq.f32.partialorder %v1610, 8.507059e+37
    %v1612 = vand.u32 %v1483, 2147483648
    %v1613 = vor.u32 1.1754944e-38, %v1612
    %v1614 = vsel %vm1611, %v1613, %v1609
    %v1615 = vmul.f32 %v1444, %v1614
    %v1616 = vrcp.pop %v1486
    %v1617 = vmul.f32 %v1486, %v1616
    %v1618 = vsub.f32 1.0, %v1617
    %v1619 = vmul.f32 %v1616, %v1618
    %v1620 = vadd.f32 %v1616, %v1619
    %vm1621 = vweird.f32 %v1486
    %vm1622 = vweird.f32 %v1616
    %vm1623 = vmor %vm1621, %vm1622
    %v1624 = vsel %vm1623, %v1616, %v1620
    %v1625 = vand.u32 2147483647, %v1486
    %vm1626 = vcmp.eq.f32.partialorder %v1625, 8.507059e+37
    %v1627 = vand.u32 %v1486, 2147483648
    %v1628 = vor.u32 1.1754944e-38, %v1627
    %v1629 = vsel %vm1626, %v1628, %v1624
    %v1630 = vmul.f32 %v1446, %v1629
    %v1631 = vrcp.pop %v1489
    %v1632 = vmul.f32 %v1489, %v1631
    %v1633 = vsub.f32 1.0, %v1632
    %v1634 = vmul.f32 %v1631, %v1633
    %v1635 = vadd.f32 %v1631, %v1634
    %vm1636 = vweird.f32 %v1489
    %vm1637 = vweird.f32 %v1631
    %vm1638 = vmor %vm1636, %vm1637
    %v1639 = vsel %vm1638, %v1631, %v1635
    %v1640 = vand.u32 2147483647, %v1489
    %vm1641 = vcmp.eq.f32.partialorder %v1640, 8.507059e+37
    %v1642 = vand.u32 %v1489, 2147483648
    %v1643 = vor.u32 1.1754944e-38, %v1642
    %v1644 = vsel %vm1641, %v1643, %v1639
    %v1645 = vmul.f32 %v1448, %v1644
    %v1646 = vrcp.pop %v1492
    %v1647 = vmul.f32 %v1492, %v1646
    %v1648 = vsub.f32 1.0, %v1647
    %v1649 = vmul.f32 %v1646, %v1648
    %v1650 = vadd.f32 %v1646, %v1649
    %vm1651 = vweird.f32 %v1492
    %vm1652 = vweird.f32 %v1646
    %vm1653 = vmor %vm1651, %vm1652
    %v1654 = vsel %vm1653, %v1646, %v1650
    %v1655 = vand.u32 2147483647, %v1492
    %vm1656 = vcmp.eq.f32.partialorder %v1655, 8.507059e+37
    %v1657 = vand.u32 %v1492, 2147483648
    %v1658 = vor.u32 1.1754944e-38, %v1657
    %v1659 = vsel %vm1656, %v1658, %v1654
    %v1660 = vmul.f32 %v1450, %v1659
    %v1661 = vrcp.pop %v1495
    %v1662 = vmul.f32 %v1495, %v1661
    %v1663 = vsub.f32 1.0, %v1662
    %v1664 = vmul.f32 %v1661, %v1663
    %v1665 = vadd.f32 %v1661, %v1664
    %vm1666 = vweird.f32 %v1495
    %vm1667 = vweird.f32 %v1661
    %vm1668 = vmor %vm1666, %vm1667
    %v1669 = vsel %vm1668, %v1661, %v1665
    %v1670 = vand.u32 2147483647, %v1495
    %vm1671 = vcmp.eq.f32.partialorder %v1670, 8.507059e+37
    %v1672 = vand.u32 %v1495, 2147483648
    %v1673 = vor.u32 1.1754944e-38, %v1672
    %v1674 = vsel %vm1671, %v1673, %v1669
    %v1675 = vmul.f32 %v1452, %v1674
    %v1676 = vrcp.pop %v1498
    %v1677 = vmul.f32 %v1498, %v1676
    %v1678 = vsub.f32 1.0, %v1677
    %v1679 = vmul.f32 %v1676, %v1678
    %v1680 = vadd.f32 %v1676, %v1679
    %vm1681 = vweird.f32 %v1498
    %vm1682 = vweird.f32 %v1676
    %vm1683 = vmor %vm1681, %vm1682
    %v1684 = vsel %vm1683, %v1676, %v1680
    %v1685 = vand.u32 2147483647, %v1498
    %vm1686 = vcmp.eq.f32.partialorder %v1685, 8.507059e+37
    %v1687 = vand.u32 %v1498, 2147483648
    %v1688 = vor.u32 1.1754944e-38, %v1687
    %v1689 = vsel %vm1686, %v1688, %v1684
    %v1690 = vmul.f32 %v1454, %v1689
    %v1691 = vrcp.pop %v1501
    %v1692 = vmul.f32 %v1501, %v1691
    %v1693 = vsub.f32 1.0, %v1692
    %v1694 = vmul.f32 %v1691, %v1693
    %v1695 = vadd.f32 %v1691, %v1694
    %vm1696 = vweird.f32 %v1501
    %vm1697 = vweird.f32 %v1691
    %vm1698 = vmor %vm1696, %vm1697
    %v1699 = vsel %vm1698, %v1691, %v1695
    %v1700 = vand.u32 2147483647, %v1501
    %vm1701 = vcmp.eq.f32.partialorder %v1700, 8.507059e+37
    %v1702 = vand.u32 %v1501, 2147483648
    %v1703 = vor.u32 1.1754944e-38, %v1702
    %v1704 = vsel %vm1701, %v1703, %v1699
    %v1705 = vmul.f32 %v1456, %v1704
    %v1706 = vrcp.pop %v1504
    %v1707 = vmul.f32 %v1504, %v1706
    %v1708 = vsub.f32 1.0, %v1707
    %v1709 = vmul.f32 %v1706, %v1708
    %v1710 = vadd.f32 %v1706, %v1709
    %vm1711 = vweird.f32 %v1504
    %vm1712 = vweird.f32 %v1706
    %vm1713 = vmor %vm1711, %vm1712
    %v1714 = vsel %vm1713, %v1706, %v1710
    %v1715 = vand.u32 2147483647, %v1504
    %vm1716 = vcmp.eq.f32.partialorder %v1715, 8.507059e+37
    %v1717 = vand.u32 %v1504, 2147483648
    %v1718 = vor.u32 1.1754944e-38, %v1717
    %v1719 = vsel %vm1716, %v1718, %v1714
    %v1720 = vmul.f32 %v1458, %v1719
    %v1721 = vrcp.pop %v1507
    %v1722 = vmul.f32 %v1507, %v1721
    %v1723 = vsub.f32 1.0, %v1722
    %v1724 = vmul.f32 %v1721, %v1723
    %v1725 = vadd.f32 %v1721, %v1724
    %vm1726 = vweird.f32 %v1507
    %vm1727 = vweird.f32 %v1721
    %vm1728 = vmor %vm1726, %vm1727
    %v1729 = vsel %vm1728, %v1721, %v1725
    %v1730 = vand.u32 2147483647, %v1507
    %vm1731 = vcmp.eq.f32.partialorder %v1730, 8.507059e+37
    %v1732 = vand.u32 %v1507, 2147483648
    %v1733 = vor.u32 1.1754944e-38, %v1732
    %v1734 = vsel %vm1731, %v1733, %v1729
    %v1735 = vmul.f32 %v1460, %v1734
    %v1736 = vrcp.pop %v1510
    %v1737 = vmul.f32 %v1510, %v1736
    %v1738 = vsub.f32 1.0, %v1737
    %v1739 = vmul.f32 %v1736, %v1738
    %v1740 = vadd.f32 %v1736, %v1739
    %vm1741 = vweird.f32 %v1510
    %vm1742 = vweird.f32 %v1736
    %vm1743 = vmor %vm1741, %vm1742
    %v1744 = vsel %vm1743, %v1736, %v1740
    %v1745 = vand.u32 2147483647, %v1510
    %vm1746 = vcmp.eq.f32.partialorder %v1745, 8.507059e+37
    %v1747 = vand.u32 %v1510, 2147483648
    %v1748 = vor.u32 1.1754944e-38, %v1747
    %v1749 = vsel %vm1746, %v1748, %v1744
    %v1750 = vmul.f32 %v1462, %v1749
    %v1751 = vrot.slane %v1555, 4
    %v1752 = vsel %vm300, %v1751, %v1525
    %v1754 = vunpack.c.l.s4 1983009808
    %v1755 = vunpack.c.0.s8 %v1754
    %v1756 = vperm.slane %v1752, %v1755
    %v1757 = vrot.slane %v1570, 4
    %v1758 = vsel %vm300, %v1757, %v1540
    %v1760 = vunpack.c.l.s4 1983009808
    %v1761 = vunpack.c.0.s8 %v1760
    %v1762 = vperm.slane %v1758, %v1761
    %v1763 = vrot.slane %v1615, 4
    %v1764 = vsel %vm300, %v1763, %v1585
    %v1766 = vunpack.c.l.s4 1983009808
    %v1767 = vunpack.c.0.s8 %v1766
    %v1768 = vperm.slane %v1764, %v1767
    %v1769 = vrot.slane %v1630, 4
    %v1770 = vsel %vm300, %v1769, %v1600
    %v1772 = vunpack.c.l.s4 1983009808
    %v1773 = vunpack.c.0.s8 %v1772
    %v1774 = vperm.slane %v1770, %v1773
    %v1775 = vrot.slane %v1762, 4
    %v1776 = vsel %vm300, %v1775, %v1756
    %v1777 = vrot.slane %v1756, 4
    %v1778 = vsel %vm300, %v1762, %v1777
    %v1780 = vunpack.c.l.s4 1934713408
    %v1781 = vunpack.c.0.s8 %v1780
    %v1782 = vperm.slane %v1776, %v1781
    %v1784 = vunpack.c.l.s4 1934713408
    %v1785 = vunpack.c.0.s8 %v1784
    %v1786 = vperm.slane %v1778, %v1785
    %v1787 = vrot.slane %v1774, 4
    %v1788 = vsel %vm300, %v1787, %v1768
    %v1789 = vrot.slane %v1768, 4
    %v1790 = vsel %vm300, %v1774, %v1789
    %v1792 = vunpack.c.l.s4 1934713408
    %v1793 = vunpack.c.0.s8 %v1792
    %v1794 = vperm.slane %v1788, %v1793
    %v1796 = vunpack.c.l.s4 1934713408
    %v1797 = vunpack.c.0.s8 %v1796
    %v1798 = vperm.slane %v1790, %v1797
    %v1799 = vrot.slane %v1794, 4
    %v1800 = vsel %vm300, %v1799, %v1782
    %v1801 = vrot.slane %v1782, 4
    %v1802 = vsel %vm300, %v1794, %v1801
    %v1803 = vrot.slane %v1798, 4
    %v1804 = vsel %vm300, %v1803, %v1786
    %v1805 = vrot.slane %v1786, 4
    %v1806 = vsel %vm300, %v1798, %v1805
    %v1807 = vrot.slane %v1675, 4
    %v1808 = vsel %vm300, %v1807, %v1645
    %v1810 = vunpack.c.l.s4 1983009808
    %v1811 = vunpack.c.0.s8 %v1810
    %v1812 = vperm.slane %v1808, %v1811
    %v1813 = vrot.slane %v1690, 4
    %v1814 = vsel %vm300, %v1813, %v1660
    %v1816 = vunpack.c.l.s4 1983009808
    %v1817 = vunpack.c.0.s8 %v1816
    %v1818 = vperm.slane %v1814, %v1817
    %v1819 = vrot.slane %v1735, 4
    %v1820 = vsel %vm300, %v1819, %v1705
    %v1822 = vunpack.c.l.s4 1983009808
    %v1823 = vunpack.c.0.s8 %v1822
    %v1824 = vperm.slane %v1820, %v1823
    %v1825 = vrot.slane %v1750, 4
    %v1826 = vsel %vm300, %v1825, %v1720
    %v1828 = vunpack.c.l.s4 1983009808
    %v1829 = vunpack.c.0.s8 %v1828
    %v1830 = vperm.slane %v1826, %v1829
    %v1831 = vrot.slane %v1818, 4
    %v1832 = vsel %vm300, %v1831, %v1812
    %v1833 = vrot.slane %v1812, 4
    %v1834 = vsel %vm300, %v1818, %v1833
    %v1836 = vunpack.c.l.s4 1934713408
    %v1837 = vunpack.c.0.s8 %v1836
    %v1838 = vperm.slane %v1832, %v1837
    %v1840 = vunpack.c.l.s4 1934713408
    %v1841 = vunpack.c.0.s8 %v1840
    %v1842 = vperm.slane %v1834, %v1841
    %v1843 = vrot.slane %v1830, 4
    %v1844 = vsel %vm300, %v1843, %v1824
    %v1845 = vrot.slane %v1824, 4
    %v1846 = vsel %vm300, %v1830, %v1845
    %v1848 = vunpack.c.l.s4 1934713408
    %v1849 = vunpack.c.0.s8 %v1848
    %v1850 = vperm.slane %v1844, %v1849
    %v1852 = vunpack.c.l.s4 1934713408
    %v1853 = vunpack.c.0.s8 %v1852
    %v1854 = vperm.slane %v1846, %v1853
    %v1855 = vrot.slane %v1850, 4
    %v1856 = vsel %vm300, %v1855, %v1838
    %v1857 = vrot.slane %v1838, 4
    %v1858 = vsel %vm300, %v1850, %v1857
    %v1859 = vrot.slane %v1854, 4
    %v1860 = vsel %vm300, %v1859, %v1842
    %v1861 = vrot.slane %v1842, 4
    %v1862 = vsel %vm300, %v1854, %v1861
    %1865 = vrot.lane.b32.xlu0 %v1802, 16
    %v1866 = vpop.permute.xlu0 %1865
    %1867 = vrot.lane.b32.xlu0 %v1858, 16
    %v1868 = vpop.permute.xlu0 %1867
    %1873 = vrot.lane.b32.xlu0 %v1804, 32
    %v1874 = vpop.permute.xlu0 %1873
    %1875 = vrot.lane.b32.xlu0 %v1860, 32
    %v1876 = vpop.permute.xlu0 %1875
    %1881 = vrot.lane.b32.xlu0 %v1806, 48
    %v1882 = vpop.permute.xlu0 %1881
    %1883 = vrot.lane.b32.xlu0 %v1862, 48
    %v1884 = vpop.permute.xlu0 %1883
    %v1887 = vsel %vm933, %v1800, %v1866
    %v1888 = vsel %vm933, %v1856, %v1868
    %v1889 = vsel %vm108, %v1887, %v1874
    %v1890 = vsel %vm108, %v1888, %v1876
    %v1891 = vsel %vm938, %v1889, %v1882
    %v1892 = vsel %vm938, %v1890, %v1884
    %v1894 = vsel %vm941, %v1891, 0
    %v1897 = vsel %vm941, %v1892, 0
    %1899 = vmatpush.msra.mxu0 0.0
    %1900 = vmatpush.msra.mxu0 0.0
    %1901 = vmatpush.msra.mxu0 0.0
    %1902 = vmatpush.msra.mxu0 0.0
    %1903 = vmatpush.msra.mxu0 0.0
    %1904 = vmatpush.msra.mxu0 0.0
    %1905 = vmatpush.msra.mxu0 0.0
    %1906 = vmatpush.msra.mxu0 0.0
    %1907 = vmatpush.msra.mxu0 %v1181
    %1908 = vmatpush.msra.mxu0 %v1180
    %1909 = vmatpush.msra.mxu0 %v1179
    %1910 = vmatpush.msra.mxu0 %v1178
    %1911 = vmatpush.msra.mxu0 %v1177
    %1912 = vmatpush.msra.mxu0 %v1176
    %1913 = vmatpush.msra.mxu0 %v1175
    %1914 = vmatpush.msra.mxu0 %v1174
    %1915 = vmatmul.f32.gmra.mxu0 %v1894
    %v1916 = vpop.f32.mrf.mxu0
    %v1917 = vadd.f32 0.0, %v1916
    %1918 = vmatmul.f32.gmra.mxu0 %v1897
    %v1919 = vpop.f32.mrf.mxu0
    %v1920 = vadd.f32 0.0, %v1919
    %1921 = vdwg.mxu0
    %s1922 = scalar_lea.vmem [#allocation5], 224
    %v1923 = vld [vmem:[%s1922] sm:$0xff]
    %v1924 = vld [vmem:[%s1922 + $0x8] sm:$0xff]
    %v1925 = vld [vmem:[%s1922 + $0x10] sm:$0xff]
    %v1926 = vld [vmem:[%s1922 + $0x18] sm:$0xff]
    %v1927 = vperm.slane %v100, 7
    %v1929 = vsel %vm108, %v1917, 0
    %v1932 = vsel %vm108, %v1920, 0
    %1934 = vmatpush.msra.mxu0 0.0
    %1935 = vmatpush.msra.mxu0 0.0
    %1936 = vmatpush.msra.mxu0 0.0
    %1937 = vmatpush.msra.mxu0 0.0
    %1938 = vmatpush.msra.mxu0 0.0
    %1939 = vmatpush.msra.mxu0 0.0
    %1940 = vmatpush.msra.mxu0 0.0
    %1941 = vmatpush.msra.mxu0 0.0
    %1942 = vmatpush.msra.mxu0 0.0
    %1943 = vmatpush.msra.mxu0 0.0
    %1944 = vmatpush.msra.mxu0 0.0
    %1945 = vmatpush.msra.mxu0 0.0
    %1946 = vmatpush.msra.mxu0 %v1926
    %1947 = vmatpush.msra.mxu0 %v1925
    %1948 = vmatpush.msra.mxu0 %v1924
    %1949 = vmatpush.msra.mxu0 %v1923
    %1950 = vmatmul.f32.gmra.mxu0 %v1929
    %v1951 = vpop.f32.mrf.mxu0
    %v1952 = vadd.f32 %v1927, %v1951
    %1953 = vmatmul.f32.gmra.mxu0 %v1932
    %v1954 = vpop.f32.mrf.mxu0
    %v1955 = vadd.f32 %v1927, %v1954
    %1956 = vdwg.mxu0
    %v1957 = vadd.f32 %v1063, %v1952
    %v1958 = vadd.f32 %v1064, %v1955
    %v1959 = vsel %vm108, %v1957, 0.0
    %1960 = vadd.xlane.f32.xlu0 %v1959
    %v1961 = vpop.xlane.xlu0 %1960
    %v1962 = vsel %vm108, %v1958, 0.0
    %1963 = vadd.xlane.f32.xlu0 %v1962
    %v1964 = vpop.xlane.xlu0 %1963
    %v1965 = vmul.f32 %v1961, %v1020
    %v1966 = vmul.f32 %v1964, %v1020
    %v1967 = vsub.f32 %v1957, %v1965
    %v1968 = vsub.f32 %v1958, %v1966
    %v1969 = vmul.f32 %v1967, %v1967
    %v1970 = vmul.f32 %v1968, %v1968
    %v1971 = vsel %vm108, %v1969, 0.0
    %1972 = vadd.xlane.f32.xlu0 %v1971
    %v1973 = vpop.xlane.xlu0 %1972
    %v1974 = vsel %vm108, %v1970, 0.0
    %1975 = vadd.xlane.f32.xlu0 %v1974
    %v1976 = vpop.xlane.xlu0 %1975
    %v1977 = vmul.f32 %v1973, %v1020
    %v1978 = vmul.f32 %v1976, %v1020
    %v1979 = vadd.f32 %v1977, 1e-05
    %v1980 = vadd.f32 %v1978, 1e-05
    %v1981 = vrsqrt.pop %v1979
    %v1982 = vmul.f32 %v1981, %v1979
    %v1983 = vmul.f32 %v1982, %v1981
    %v1984 = vmul.f32 0.5, %v1983
    %v1985 = vsub.f32 1.5, %v1984
    %v1986 = vmul.f32 %v1981, %v1985
    %vm1987 = vweird.f32 %v1979
    %vm1988 = vweird.f32 %v1981
    %vm1989 = vmor %vm1987, %vm1988
    %v1990 = vsel %vm1989, %v1981, %v1986
    %v1991 = vrsqrt.pop %v1980
    %v1992 = vmul.f32 %v1991, %v1980
    %v1993 = vmul.f32 %v1992, %v1991
    %v1994 = vmul.f32 0.5, %v1993
    %v1995 = vsub.f32 1.5, %v1994
    %v1996 = vmul.f32 %v1991, %v1995
    %vm1997 = vweird.f32 %v1980
    %vm1998 = vweird.f32 %v1991
    %vm1999 = vmor %vm1997, %vm1998
    %v2000 = vsel %vm1999, %v1991, %v1996
    %v2001 = vmul.f32 %v1967, %v1990
    %v2002 = vmul.f32 %v1968, %v2000
    %v2003 = vperm.slane %v102, 2
    %v2004 = vmul.f32 %v2001, %v2003
    %v2005 = vmul.f32 %v2002, %v2003
    %v2006 = vperm.slane %v102, 3
    %v2007 = vadd.f32 %v2004, %v2006
    %v2008 = vadd.f32 %v2005, %v2006
    %v2009 = vld [vmem:[%s6] sm:$0xff]
    %v2010 = vld [vmem:[%s6 + $0x8] sm:$0xff]
    %v2011 = vld [vmem:[%s6 + $0x10] sm:$0xff]
    %v2012 = vld [vmem:[%s6 + $0x18] sm:$0xff]
    %v2013 = vperm.slane %v101, 0
    %v2015 = vsel %vm108, %v2007, 0
    %v2018 = vsel %vm108, %v2008, 0
    %2020 = vmatpush.msra.mxu0 0.0
    %2021 = vmatpush.msra.mxu0 0.0
    %2022 = vmatpush.msra.mxu0 0.0
    %2023 = vmatpush.msra.mxu0 0.0
    %2024 = vmatpush.msra.mxu0 0.0
    %2025 = vmatpush.msra.mxu0 0.0
    %2026 = vmatpush.msra.mxu0 0.0
    %2027 = vmatpush.msra.mxu0 0.0
    %2028 = vmatpush.msra.mxu0 0.0
    %2029 = vmatpush.msra.mxu0 0.0
    %2030 = vmatpush.msra.mxu0 0.0
    %2031 = vmatpush.msra.mxu0 0.0
    %2032 = vmatpush.msra.mxu0 %v2012
    %2033 = vmatpush.msra.mxu0 %v2011
    %2034 = vmatpush.msra.mxu0 %v2010
    %2035 = vmatpush.msra.mxu0 %v2009
    %2036 = vmatmul.f32.gmra.mxu0 %v2015
    %v2037 = vpop.f32.mrf.mxu0
    %v2038 = vadd.f32 %v2013, %v2037
    %2039 = vmatmul.f32.gmra.mxu0 %v2018
    %v2040 = vpop.f32.mrf.mxu0
    %v2041 = vadd.f32 %v2013, %v2040
    %2042 = vdwg.mxu0
    %v2043 = vmax.f32 %v2038, 0.0
    %v2044 = vmax.f32 %v2041, 0.0
    %v2045 = vld [vmem:[%s7] sm:$0xff]
    %v2046 = vld [vmem:[%s7 + $0x8] sm:$0xff]
    %v2047 = vld [vmem:[%s7 + $0x10] sm:$0xff]
    %v2048 = vld [vmem:[%s7 + $0x18] sm:$0xff]
    %v2049 = vld [vmem:[%s7 + $0x20] sm:$0xff]
    %v2050 = vld [vmem:[%s7 + $0x28] sm:$0xff]
    %v2051 = vld [vmem:[%s7 + $0x30] sm:$0xff]
    %v2052 = vld [vmem:[%s7 + $0x38] sm:$0xff]
    %v2053 = vperm.slane %v101, 1
    %v2055 = vsel %vm941, %v2043, 0
    %v2058 = vsel %vm941, %v2044, 0
    %2060 = vmatpush.msra.mxu0 0.0
    %2061 = vmatpush.msra.mxu0 0.0
    %2062 = vmatpush.msra.mxu0 0.0
    %2063 = vmatpush.msra.mxu0 0.0
    %2064 = vmatpush.msra.mxu0 0.0
    %2065 = vmatpush.msra.mxu0 0.0
    %2066 = vmatpush.msra.mxu0 0.0
    %2067 = vmatpush.msra.mxu0 0.0
    %2068 = vmatpush.msra.mxu0 %v2052
    %2069 = vmatpush.msra.mxu0 %v2051
    %2070 = vmatpush.msra.mxu0 %v2050
    %2071 = vmatpush.msra.mxu0 %v2049
    %2072 = vmatpush.msra.mxu0 %v2048
    %2073 = vmatpush.msra.mxu0 %v2047
    %2074 = vmatpush.msra.mxu0 %v2046
    %2075 = vmatpush.msra.mxu0 %v2045
    %2076 = vmatmul.f32.gmra.mxu0 %v2055
    %v2077 = vpop.f32.mrf.mxu0
    %v2078 = vadd.f32 %v2053, %v2077
    %2079 = vmatmul.f32.gmra.mxu0 %v2058
    %v2080 = vpop.f32.mrf.mxu0
    %v2081 = vadd.f32 %v2053, %v2080
    %2082 = vdwg.mxu0
    %v2083 = vadd.f32 %v2007, %v2078
    %v2084 = vadd.f32 %v2008, %v2081
    %v2085 = vsel %vm108, %v2083, 0.0
    %2086 = vadd.xlane.f32.xlu0 %v2085
    %v2087 = vpop.xlane.xlu0 %2086
    %v2088 = vsel %vm108, %v2084, 0.0
    %2089 = vadd.xlane.f32.xlu0 %v2088
    %v2090 = vpop.xlane.xlu0 %2089
    %v2091 = vmul.f32 %v2087, %v1020
    %v2092 = vmul.f32 %v2090, %v1020
    %v2093 = vsub.f32 %v2083, %v2091
    %v2094 = vsub.f32 %v2084, %v2092
    %v2095 = vmul.f32 %v2093, %v2093
    %v2096 = vmul.f32 %v2094, %v2094
    %v2097 = vsel %vm108, %v2095, 0.0
    %2098 = vadd.xlane.f32.xlu0 %v2097
    %v2099 = vpop.xlane.xlu0 %2098
    %v2100 = vsel %vm108, %v2096, 0.0
    %2101 = vadd.xlane.f32.xlu0 %v2100
    %v2102 = vpop.xlane.xlu0 %2101
    %v2103 = vmul.f32 %v2099, %v1020
    %v2104 = vmul.f32 %v2102, %v1020
    %v2105 = vadd.f32 %v2103, 1e-05
    %v2106 = vadd.f32 %v2104, 1e-05
    %v2107 = vrsqrt.pop %v2105
    %v2108 = vmul.f32 %v2107, %v2105
    %v2109 = vmul.f32 %v2108, %v2107
    %v2110 = vmul.f32 0.5, %v2109
    %v2111 = vsub.f32 1.5, %v2110
    %v2112 = vmul.f32 %v2107, %v2111
    %vm2113 = vweird.f32 %v2105
    %vm2114 = vweird.f32 %v2107
    %vm2115 = vmor %vm2113, %vm2114
    %v2116 = vsel %vm2115, %v2107, %v2112
    %v2117 = vrsqrt.pop %v2106
    %v2118 = vmul.f32 %v2117, %v2106
    %v2119 = vmul.f32 %v2118, %v2117
    %v2120 = vmul.f32 0.5, %v2119
    %v2121 = vsub.f32 1.5, %v2120
    %v2122 = vmul.f32 %v2117, %v2121
    %vm2123 = vweird.f32 %v2106
    %vm2124 = vweird.f32 %v2117
    %vm2125 = vmor %vm2123, %vm2124
    %v2126 = vsel %vm2125, %v2117, %v2122
    %v2127 = vmul.f32 %v2093, %v2116
    %v2128 = vmul.f32 %v2094, %v2126
    %v2129 = vperm.slane %v102, 4
    %v2130 = vmul.f32 %v2127, %v2129
    %v2131 = vmul.f32 %v2128, %v2129
    %v2132 = vperm.slane %v102, 5
    %v2133 = vadd.f32 %v2130, %v2132
    %v2134 = vadd.f32 %v2131, %v2132
    %2135 = vst.msk [vmem:[#allocation10] sm:$0xff] %vm108, %v2133
    %2136 = vst.msk [vmem:[#allocation10 + $0x8] sm:$0xff] %vm108, %v2134
    // Predicated region
    $region58: #{tpu_custom_call.1} parent=1 // pred_check
      _
    $region59: #{tpu_custom_call.1} parent=1 // pred_check_branch
      %2138 = sbr.rel (0) target = $region61
    $region60: #{tpu_custom_call.1} parent=1 // pred_region
      %2140 = vsyncadd [#allocation4], 0
      %s2141 = sshll.u32 [#allocation10], 4
      %s2142 = int_to_ptr.vmem [resolvable:$true] %s2141
      %s2143 = sshll.u32 %s10, 4
      %s2144 = int_to_ptr.hbm [resolvable:$true] %s2143
      %2149 = dma.vmem_to_hbm [thread:$0]  %s2142, 256, %s2144, [#allocation4], 128, 128, 8
    $region61: #{tpu_custom_call.1} parent=1 // pred_fallthru
      _
    // Predicated region
    $region62: #{tpu_custom_call.1} parent=1 // pred_check
      _
    $region63: #{tpu_custom_call.1} parent=1 // pred_check_branch
      %2151 = sbr.rel (0) target = $region65
    $region64: #{tpu_custom_call.1} parent=1 // pred_region
      %2153 = dma.done [#allocation4], 256
    $region65: #{tpu_custom_call.1} parent=1 // pred_fallthru
      _
    %2154 = vsyncpa [#allocation3], 1
    %2155 = vsyncpa [#allocation6], 1
    %2156 = vsyncpa [#allocation9], 1
    %2157 = vsyncpa [#allocation4], 1

</llo_original>
